<compile_context>
chip_gen: v6e
topology: v6e:2x2x1
jax: 0.10.0
libtpu: 0.0.40
codegen_flags: <defaults>
</compile_context>

<pallas_src>
import math
from functools import partial

import jax
import jax.numpy as jnp
from jax.experimental import pallas as pl
from jax.experimental.pallas import tpu as pltpu


def _round_up(x, m):
    return ((x + m - 1) // m) * m


def make_kernel(level_sizes, hier_pad, num_agents, agent_size, scale):
    """Builds the fused forward kernel (static config baked in via closure)."""
    seg_bounds = []
    off = 0
    for s in level_sizes:
        seg_bounds.append((off, off + s))
        off += s

    def kernel(
        x_ref, w_in_ref, b_in_ref,
        epi_wq_ref, epi_bq_ref, epi_mem_t_ref, epi_mem_ref,
        buf_rest_t_ref, buf_rest_ref,
        hier_wq_ref, hier_bq_ref, hier_bank_t_ref, hier_bank_ref,
        swarm_wq_ref, swarm_bq_ref, swarm_bank_t_ref, swarm_bank_ref,
        w1_epi_ref, w1_work_ref, w1_hier_ref, w1_swarm_ref, b1_ref,
        w2_ref, b2_ref,
        out_ref,
    ):
        f32 = jnp.float32
        bf16 = jnp.bfloat16

        # ---- input projection (bf16 MXU, f32 accumulate) ----
        x_bf = x_ref[...].astype(bf16)
        hidden = (jnp.dot(x_bf, w_in_ref[...], preferred_element_type=f32)
                  + b_in_ref[...])
        h_bf = hidden.astype(bf16)

        # ---- EpisodicMemory ----
        q_e = (jnp.dot(h_bf, epi_wq_ref[...], preferred_element_type=f32)
               + epi_bq_ref[...]).astype(bf16)
        s_e = jnp.dot(q_e, epi_mem_t_ref[...], preferred_element_type=f32) * scale
        m_e = jnp.max(s_e, axis=-1, keepdims=True)
        e_e = jnp.exp(s_e - m_e)
        inv_e = pl.reciprocal(jnp.sum(e_e, axis=-1, keepdims=True), approx=True)
        episodic_out = jnp.dot(e_e.astype(bf16), epi_mem_ref[...],
                               preferred_element_type=f32) * inv_e

        # ---- WorkingMemoryBuffer: bank = [hidden (written rows); buf tail] ----
        # Joint softmax over two score blocks -> no bank concat materialized.
        s1 = jax.lax.dot_general(h_bf, h_bf, (((1,), (1,)), ((), ())),
                                 preferred_element_type=f32) * scale
        s2 = jnp.dot(h_bf, buf_rest_t_ref[...], preferred_element_type=f32) * scale
        m_w = jnp.maximum(jnp.max(s1, axis=-1, keepdims=True),
                          jnp.max(s2, axis=-1, keepdims=True))
        e1 = jnp.exp(s1 - m_w)
        e2 = jnp.exp(s2 - m_w)
        inv_w = pl.reciprocal(jnp.sum(e1, axis=-1, keepdims=True)
                              + jnp.sum(e2, axis=-1, keepdims=True), approx=True)
        working_out = (jnp.dot(e1.astype(bf16), h_bf, preferred_element_type=f32)
                       + jnp.dot(e2.astype(bf16), buf_rest_ref[...],
                                 preferred_element_type=f32)) * inv_w

        # ---- HierarchicalMemory: fused bank, per-level segmented softmax, mean ----
        q_h = (jnp.dot(h_bf, hier_wq_ref[...], preferred_element_type=f32)
               + hier_bq_ref[...]).astype(bf16)
        s_h = jnp.dot(q_h, hier_bank_t_ref[...], preferred_element_type=f32) * scale
        col_h = jax.lax.broadcasted_iota(jnp.int32, (1, hier_pad), 1)
        attn_h = jnp.zeros_like(s_h)
        for lo, hi in seg_bounds:  # static unroll (3 levels)
            msk = (col_h >= lo) & (col_h < hi)
            s_seg = jnp.where(msk, s_h, -jnp.inf)
            m_seg = jnp.max(s_seg, axis=-1, keepdims=True)
            e_seg = jnp.exp(s_seg - m_seg)          # 0 outside the segment
            inv_seg = pl.reciprocal(jnp.sum(e_seg, axis=-1, keepdims=True),
                                    approx=True)
            attn_h = attn_h + e_seg * inv_seg
        attn_h = attn_h * (1.0 / len(seg_bounds))
        hierarchical_out = jnp.dot(attn_h.astype(bf16), hier_bank_ref[...],
                                   preferred_element_type=f32)

        # ---- SharedSwarmMemory: fused agent banks, per-agent softmax, mean ----
        q_s = (jnp.dot(h_bf, swarm_wq_ref[...], preferred_element_type=f32)
               + swarm_bq_ref[...]).astype(bf16)
        s_s = jnp.dot(q_s, swarm_bank_t_ref[...], preferred_element_type=f32) * scale
        col_s = jax.lax.broadcasted_iota(jnp.int32, (1, num_agents * agent_size), 1)
        attn_s = jnp.zeros_like(s_s)
        for a in range(num_agents):  # static unroll (4 agents)
            lo = a * agent_size
            msk = (col_s >= lo) & (col_s < lo + agent_size)
            s_seg = jnp.where(msk, s_s, -jnp.inf)
            m_seg = jnp.max(s_seg, axis=-1, keepdims=True)
            e_seg = jnp.exp(s_seg - m_seg)
            inv_seg = pl.reciprocal(jnp.sum(e_seg, axis=-1, keepdims=True),
                                    approx=True)
            attn_s = attn_s + e_seg * inv_seg
        attn_s = attn_s * (1.0 / num_agents)
        consensus = jnp.dot(attn_s.astype(bf16), swarm_bank_ref[...],
                            preferred_element_type=f32)

        # ---- Classifier: no lane-concat; sum of four column-block matmuls ----
        h1 = (jnp.dot(episodic_out.astype(bf16), w1_epi_ref[...],
                      preferred_element_type=f32)
              + jnp.dot(working_out.astype(bf16), w1_work_ref[...],
                        preferred_element_type=f32)
              + jnp.dot(hierarchical_out.astype(bf16), w1_hier_ref[...],
                        preferred_element_type=f32)
              + jnp.dot(consensus.astype(bf16), w1_swarm_ref[...],
                        preferred_element_type=f32)
              + b1_ref[...])
        h1 = jnp.maximum(h1, 0.0)
        # Dropout(p=0.1) is identity in eval mode.
        logits = (jnp.dot(h1.astype(bf16), w2_ref[...], preferred_element_type=f32)
                  + b2_ref[...])
        out_ref[...] = logits.astype(out_ref.dtype)

    return kernel


def prepare_params(params, batch_block, num_classes):
    """One-time host-side layout prep: transpose, fuse banks, pad, cast to bf16."""
    bf = jnp.bfloat16
    f32 = jnp.float32
    H = params["w_in"].shape[0]

    # fused hierarchical bank (padded rows are masked out in-kernel)
    hier_levels = [params["hier_m0"], params["hier_m1"], params["hier_m2"]]
    level_sizes = [b.shape[0] for b in hier_levels]
    total = sum(level_sizes)
    hier_pad = _round_up(total, 8)
    hier_bank = jnp.concatenate(hier_levels, axis=0)
    hier_bank = jnp.pad(hier_bank, ((0, hier_pad - total), (0, 0)))

    # fused swarm bank
    swarm = params["swarm_mem"]                       # [A, Ms, H]
    num_agents, agent_size, _ = swarm.shape
    swarm_bank = swarm.reshape(num_agents * agent_size, H)

    # working buffer: first `batch_block` rows are overwritten by the batch
    # inside the kernel; only the surviving tail is shipped in.
    work_buf = params["work_buf"]
    assert batch_block < work_buf.shape[0], "batch tile must fit in the buffer"
    buf_rest = work_buf[batch_block:]

    # classifier: split W1 into column blocks (kills the lane-axis concat),
    # pad W2/b2 output lanes to a lane-dense width.
    w1_t = params["cls_w1"].T                          # [4H, 2H]
    out_pad = _round_up(num_classes, 128)
    w2_t = jnp.pad(params["cls_w2"].T, ((0, 0), (0, out_pad - num_classes)))
    b2 = jnp.pad(params["cls_b2"], ((0, 0), (0, out_pad - num_classes)))

    prepped = {
        "w_in_t": params["w_in"].T.astype(bf),
        "b_in": params["b_in"].astype(f32),
        "epi_wq_t": params["epi_wq"].T.astype(bf),
        "epi_bq": params["epi_bq"].astype(f32),
        "epi_mem_t": params["epi_mem"].T.astype(bf),
        "epi_mem": params["epi_mem"].astype(bf),
        "buf_rest_t": buf_rest.T.astype(bf),
        "buf_rest": buf_rest.astype(bf),
        "hier_wq_t": params["hier_wq"].T.astype(bf),
        "hier_bq": params["hier_bq"].astype(f32),
        "hier_bank_t": hier_bank.T.astype(bf),
        "hier_bank": hier_bank.astype(bf),
        "swarm_wq_t": params["swarm_wq"].T.astype(bf),
        "swarm_bq": params["swarm_bq"].astype(f32),
        "swarm_bank_t": swarm_bank.T.astype(bf),
        "swarm_bank": swarm_bank.astype(bf),
        "w1_epi_t": w1_t[0 * H:1 * H].astype(bf),
        "w1_work_t": w1_t[1 * H:2 * H].astype(bf),
        "w1_hier_t": w1_t[2 * H:3 * H].astype(bf),
        "w1_swarm_t": w1_t[3 * H:4 * H].astype(bf),
        "cls_b1": params["cls_b1"].astype(f32),
        "w2_t": w2_t.astype(bf),
        "cls_b2": b2.astype(f32),
    }
    meta = {"level_sizes": level_sizes, "hier_pad": hier_pad,
            "num_agents": num_agents, "agent_size": agent_size,
            "out_pad": out_pad, "hidden_dim": H}
    return prepped, meta


_PARAM_ORDER = (
    "w_in_t", "b_in",
    "epi_wq_t", "epi_bq", "epi_mem_t", "epi_mem",
    "buf_rest_t", "buf_rest",
    "hier_wq_t", "hier_bq", "hier_bank_t", "hier_bank",
    "swarm_wq_t", "swarm_bq", "swarm_bank_t", "swarm_bank",
    "w1_epi_t", "w1_work_t", "w1_hier_t", "w1_swarm_t", "cls_b1",
    "w2_t", "cls_b2",
)


def memory_augmented_network(x, params, num_classes):
    """Whole forward runs as one Pallas kernel; batch axis is a parallel grid."""
    B, input_dim = x.shape
    block_b = B if B <= 128 else 128
    assert B % block_b == 0, "batch must be a multiple of the 128-row tile"

    # TODO(synk): when B > block_b each batch tile only writes its own rows into
    #             the working buffer (the global-batch write is not shared
    #             across tiles).
    prepped, meta = prepare_params(params, block_b, num_classes)
    param_list = [prepped[k] for k in _PARAM_ORDER]

    H = meta["hidden_dim"]
    kernel = make_kernel(
        level_sizes=meta["level_sizes"], hier_pad=meta["hier_pad"],
        num_agents=meta["num_agents"], agent_size=meta["agent_size"],
        scale=1.0 / math.sqrt(H),
    )

    grid = (B // block_b,)
    in_specs = [pl.BlockSpec((block_b, input_dim), lambda i: (i, 0))]
    # all params are 2-D, whole-array resident blocks
    in_specs += [pl.BlockSpec(p.shape, lambda i: (0, 0)) for p in param_list]
    out_spec = pl.BlockSpec((block_b, meta["out_pad"]), lambda i: (i, 0))

    out = pl.pallas_call(
        kernel,
        out_shape=jax.ShapeDtypeStruct((B, meta["out_pad"]), jnp.float32),
        grid=grid,
        in_specs=in_specs,
        out_specs=out_spec,
        compiler_params=pltpu.CompilerParams(
            dimension_semantics=("parallel",)),   # shards batch over v7x's 2 TCs
    )(x, *param_list)
    return out[:, :num_classes]


def init_params(key, input_dim, hidden_dim, num_classes, memory_size, num_agents):
    """Params in PyTorch nn.Linear convention (W: [out, in]); f32 master copy."""
    ks = jax.random.split(key, 16)
    n = lambda k, shape, s=0.05: (s * jax.random.normal(k, shape)).astype(jnp.float32)
    H = hidden_dim
    return {
        "w_in": n(ks[0], (H, input_dim)),
        "b_in": n(ks[1], (1, H)),
        "epi_mem": n(ks[2], (memory_size, H)),
        "epi_wq": n(ks[3], (H, H)),
        "epi_bq": n(ks[4], (1, H)),
        "work_buf": n(ks[5], (memory_size // 2, H)),
        "hier_wq": n(ks[6], (H, H)),
        "hier_bq": n(ks[7], (1, H)),
        "hier_m0": n(ks[8], (memory_size, H)),
        "hier_m1": n(ks[9], (memory_size // 2, H)),
        "hier_m2": n(ks[10], (memory_size // 4, H)),
        "swarm_mem": n(ks[11], (num_agents, memory_size // num_agents, H)),
        "swarm_wq": n(ks[12], (H, H)),
        "swarm_bq": n(ks[13], (1, H)),
        "cls_w1": n(ks[14], (2 * H, 4 * H)),
        "cls_b1": jnp.zeros((1, 2 * H), jnp.float32),
        "cls_w2": n(ks[15], (num_classes, 2 * H)),
        "cls_b2": jnp.zeros((1, num_classes), jnp.float32),
    }


if __name__ == "__main__":
    B = 8
    input_dim = 16
    hidden_dim = 32
    num_classes = 10
    memory_size = 32
    num_agents = 4

    key = jax.random.PRNGKey(0)
    kx, kp = jax.random.split(key)
    x = jax.random.normal(kx, (B, input_dim), dtype=jnp.float32)
    params = init_params(kp, input_dim, hidden_dim, num_classes,
                         memory_size, num_agents)

    out = memory_augmented_network(x, params, num_classes)
    out = jax.block_until_ready(out)
    assert out.shape == (B, num_classes), out.shape
    assert jnp.all(jnp.isfinite(out))
    print("KERNEL_OK")
</pallas_src>

<mosaic_0001>
module attributes {stable_mosaic.version = 11 : i64} {
  func.func @kernel(%arg0: i32, %arg1: memref<8x16xf32, #tpu.memory_space<vmem>>, %arg2: memref<16x32xbf16, #tpu.memory_space<vmem>>, %arg3: memref<1x32xf32, #tpu.memory_space<vmem>>, %arg4: memref<32x32xbf16, #tpu.memory_space<vmem>>, %arg5: memref<1x32xf32, #tpu.memory_space<vmem>>, %arg6: memref<32x32xbf16, #tpu.memory_space<vmem>>, %arg7: memref<32x32xbf16, #tpu.memory_space<vmem>>, %arg8: memref<32x8xbf16, #tpu.memory_space<vmem>>, %arg9: memref<8x32xbf16, #tpu.memory_space<vmem>>, %arg10: memref<32x32xbf16, #tpu.memory_space<vmem>>, %arg11: memref<1x32xf32, #tpu.memory_space<vmem>>, %arg12: memref<32x56xbf16, #tpu.memory_space<vmem>>, %arg13: memref<56x32xbf16, #tpu.memory_space<vmem>>, %arg14: memref<32x32xbf16, #tpu.memory_space<vmem>>, %arg15: memref<1x32xf32, #tpu.memory_space<vmem>>, %arg16: memref<32x32xbf16, #tpu.memory_space<vmem>>, %arg17: memref<32x32xbf16, #tpu.memory_space<vmem>>, %arg18: memref<32x64xbf16, #tpu.memory_space<vmem>>, %arg19: memref<32x64xbf16, #tpu.memory_space<vmem>>, %arg20: memref<32x64xbf16, #tpu.memory_space<vmem>>, %arg21: memref<32x64xbf16, #tpu.memory_space<vmem>>, %arg22: memref<1x64xf32, #tpu.memory_space<vmem>>, %arg23: memref<64x128xbf16, #tpu.memory_space<vmem>>, %arg24: memref<1x128xf32, #tpu.memory_space<vmem>>, %arg25: memref<8x128xf32, #tpu.memory_space<vmem>>) attributes {dimension_semantics = [#tpu.dimension_semantics<parallel>], iteration_bounds = array<i64: 1>, scalar_prefetch = 0 : i64, scratch_operands = 0 : i64, tpu.core_type = #tpu.core_type<tc>, window_params = [{transform_indices = @transform_0, window_bounds = array<i64: 8, 16>}, {pipeline_mode = #tpu.pipeline_mode<synchronous>, transform_indices = @transform_1, window_bounds = array<i64: 16, 32>}, {pipeline_mode = #tpu.pipeline_mode<synchronous>, transform_indices = @transform_2, window_bounds = array<i64: 1, 32>}, {pipeline_mode = #tpu.pipeline_mode<synchronous>, transform_indices = @transform_3, window_bounds = array<i64: 32, 32>}, {pipeline_mode = #tpu.pipeline_mode<synchronous>, transform_indices = @transform_4, window_bounds = array<i64: 1, 32>}, {pipeline_mode = #tpu.pipeline_mode<synchronous>, transform_indices = @transform_5, window_bounds = array<i64: 32, 32>}, {pipeline_mode = #tpu.pipeline_mode<synchronous>, transform_indices = @transform_6, window_bounds = array<i64: 32, 32>}, {pipeline_mode = #tpu.pipeline_mode<synchronous>, transform_indices = @transform_7, window_bounds = array<i64: 32, 8>}, {pipeline_mode = #tpu.pipeline_mode<synchronous>, transform_indices = @transform_8, window_bounds = array<i64: 8, 32>}, {pipeline_mode = #tpu.pipeline_mode<synchronous>, transform_indices = @transform_9, window_bounds = array<i64: 32, 32>}, {pipeline_mode = #tpu.pipeline_mode<synchronous>, transform_indices = @transform_10, window_bounds = array<i64: 1, 32>}, {pipeline_mode = #tpu.pipeline_mode<synchronous>, transform_indices = @transform_11, window_bounds = array<i64: 32, 56>}, {pipeline_mode = #tpu.pipeline_mode<synchronous>, transform_indices = @transform_12, window_bounds = array<i64: 56, 32>}, {pipeline_mode = #tpu.pipeline_mode<synchronous>, transform_indices = @transform_13, window_bounds = array<i64: 32, 32>}, {pipeline_mode = #tpu.pipeline_mode<synchronous>, transform_indices = @transform_14, window_bounds = array<i64: 1, 32>}, {pipeline_mode = #tpu.pipeline_mode<synchronous>, transform_indices = @transform_15, window_bounds = array<i64: 32, 32>}, {pipeline_mode = #tpu.pipeline_mode<synchronous>, transform_indices = @transform_16, window_bounds = array<i64: 32, 32>}, {pipeline_mode = #tpu.pipeline_mode<synchronous>, transform_indices = @transform_17, window_bounds = array<i64: 32, 64>}, {pipeline_mode = #tpu.pipeline_mode<synchronous>, transform_indices = @transform_18, window_bounds = array<i64: 32, 64>}, {pipeline_mode = #tpu.pipeline_mode<synchronous>, transform_indices = @transform_19, window_bounds = array<i64: 32, 64>}, {pipeline_mode = #tpu.pipeline_mode<synchronous>, transform_indices = @transform_20, window_bounds = array<i64: 32, 64>}, {pipeline_mode = #tpu.pipeline_mode<synchronous>, transform_indices = @transform_21, window_bounds = array<i64: 1, 64>}, {pipeline_mode = #tpu.pipeline_mode<synchronous>, transform_indices = @transform_22, window_bounds = array<i64: 64, 128>}, {pipeline_mode = #tpu.pipeline_mode<synchronous>, transform_indices = @transform_23, window_bounds = array<i64: 1, 128>}, {transform_indices = @transform_24, window_bounds = array<i64: 8, 128>}]} {
    %c0 = arith.constant 0 : index
    %c0_0 = arith.constant 0 : index
    %0 = vector.load %arg1[%c0, %c0_0] : memref<8x16xf32, #tpu.memory_space<vmem>>, vector<8x16xf32>
    %1 = arith.truncf %0 : vector<8x16xf32> to vector<8x16xbf16>
    %c0_1 = arith.constant 0 : index
    %c0_2 = arith.constant 0 : index
    %2 = vector.load %arg2[%c0_1, %c0_2] : memref<16x32xbf16, #tpu.memory_space<vmem>>, vector<16x32xbf16>
    %cst = arith.constant dense<0.000000e+00> : vector<8x32xf32>
    %3 = tpu.matmul %1, %2, %cst {dimension_numbers = #tpu.dot_dimension_numbers<[1], [0], [0], [1], [0, 0, 1, 1], [], []>} : vector<8x16xbf16>, vector<16x32xbf16>, vector<8x32xf32> -> vector<8x32xf32>
    %c0_3 = arith.constant 0 : index
    %c0_4 = arith.constant 0 : index
    %4 = vector.load %arg3[%c0_3, %c0_4] : memref<1x32xf32, #tpu.memory_space<vmem>>, vector<1x32xf32>
    %5 = vector.broadcast %4 : vector<1x32xf32> to vector<8x32xf32>
    %6 = arith.addf %3, %5 : vector<8x32xf32>
    %7 = arith.truncf %6 : vector<8x32xf32> to vector<8x32xbf16>
    %c0_5 = arith.constant 0 : index
    %c0_6 = arith.constant 0 : index
    %8 = vector.load %arg4[%c0_5, %c0_6] : memref<32x32xbf16, #tpu.memory_space<vmem>>, vector<32x32xbf16>
    %cst_7 = arith.constant dense<0.000000e+00> : vector<8x32xf32>
    %9 = tpu.matmul %7, %8, %cst_7 {dimension_numbers = #tpu.dot_dimension_numbers<[1], [0], [0], [1], [0, 0, 1, 1], [], []>} : vector<8x32xbf16>, vector<32x32xbf16>, vector<8x32xf32> -> vector<8x32xf32>
    %c0_8 = arith.constant 0 : index
    %c0_9 = arith.constant 0 : index
    %10 = vector.load %arg5[%c0_8, %c0_9] : memref<1x32xf32, #tpu.memory_space<vmem>>, vector<1x32xf32>
    %11 = vector.broadcast %10 : vector<1x32xf32> to vector<8x32xf32>
    %12 = arith.addf %9, %11 : vector<8x32xf32>
    %13 = arith.truncf %12 : vector<8x32xf32> to vector<8x32xbf16>
    %c0_10 = arith.constant 0 : index
    %c0_11 = arith.constant 0 : index
    %14 = vector.load %arg6[%c0_10, %c0_11] : memref<32x32xbf16, #tpu.memory_space<vmem>>, vector<32x32xbf16>
    %cst_12 = arith.constant dense<0.000000e+00> : vector<8x32xf32>
    %15 = tpu.matmul %13, %14, %cst_12 {dimension_numbers = #tpu.dot_dimension_numbers<[1], [0], [0], [1], [0, 0, 1, 1], [], []>} : vector<8x32xbf16>, vector<32x32xbf16>, vector<8x32xf32> -> vector<8x32xf32>
    %cst_13 = arith.constant 0.176776692 : f32
    %16 = vector.broadcast %cst_13 : f32 to vector<8x32xf32>
    %17 = arith.mulf %15, %16 : vector<8x32xf32>
    %cst_14 = arith.constant dense<0xFF800000> : vector<8xf32>
    %18 = vector.multi_reduction <maximumf>, %17, %cst_14 [1] : vector<8x32xf32> to vector<8xf32>
    %19 = vector.shape_cast %18 : vector<8xf32> to vector<8x1xf32>
    %20 = vector.broadcast %19 : vector<8x1xf32> to vector<8x32xf32>
    %21 = arith.subf %17, %20 : vector<8x32xf32>
    %22 = math.exp %21 : vector<8x32xf32>
    %cst_15 = arith.constant dense<0.000000e+00> : vector<8xf32>
    %23 = vector.multi_reduction <add>, %22, %cst_15 [1] : vector<8x32xf32> to vector<8xf32>
    %24 = vector.shape_cast %23 : vector<8xf32> to vector<8x1xf32>
    %25 = tpu.reciprocal %24 {approx = true} : vector<8x1xf32> -> vector<8x1xf32>
    %26 = arith.truncf %22 : vector<8x32xf32> to vector<8x32xbf16>
    %c0_16 = arith.constant 0 : index
    %c0_17 = arith.constant 0 : index
    %27 = vector.load %arg7[%c0_16, %c0_17] : memref<32x32xbf16, #tpu.memory_space<vmem>>, vector<32x32xbf16>
    %cst_18 = arith.constant dense<0.000000e+00> : vector<8x32xf32>
    %28 = tpu.matmul %26, %27, %cst_18 {dimension_numbers = #tpu.dot_dimension_numbers<[1], [0], [0], [1], [0, 0, 1, 1], [], []>} : vector<8x32xbf16>, vector<32x32xbf16>, vector<8x32xf32> -> vector<8x32xf32>
    %29 = vector.broadcast %25 : vector<8x1xf32> to vector<8x32xf32>
    %30 = arith.mulf %28, %29 : vector<8x32xf32>
    %cst_19 = arith.constant dense<0.000000e+00> : vector<8x8xf32>
    %31 = tpu.matmul %7, %7, %cst_19 {dimension_numbers = #tpu.dot_dimension_numbers<[1], [1], [0], [0], [0, 0, 1, 0], [], []>} : vector<8x32xbf16>, vector<8x32xbf16>, vector<8x8xf32> -> vector<8x8xf32>
    %cst_20 = arith.constant 0.176776692 : f32
    %32 = vector.broadcast %cst_20 : f32 to vector<8x8xf32>
    %33 = arith.mulf %31, %32 : vector<8x8xf32>
    %c0_21 = arith.constant 0 : index
    %c0_22 = arith.constant 0 : index
    %34 = vector.load %arg8[%c0_21, %c0_22] : memref<32x8xbf16, #tpu.memory_space<vmem>>, vector<32x8xbf16>
    %cst_23 = arith.constant dense<0.000000e+00> : vector<8x8xf32>
    %35 = tpu.matmul %7, %34, %cst_23 {dimension_numbers = #tpu.dot_dimension_numbers<[1], [0], [0], [1], [0, 0, 1, 1], [], []>} : vector<8x32xbf16>, vector<32x8xbf16>, vector<8x8xf32> -> vector<8x8xf32>
    %cst_24 = arith.constant 0.176776692 : f32
    %36 = vector.broadcast %cst_24 : f32 to vector<8x8xf32>
    %37 = arith.mulf %35, %36 : vector<8x8xf32>
    %cst_25 = arith.constant dense<0xFF800000> : vector<8xf32>
    %38 = vector.multi_reduction <maximumf>, %33, %cst_25 [1] : vector<8x8xf32> to vector<8xf32>
    %39 = vector.shape_cast %38 : vector<8xf32> to vector<8x1xf32>
    %cst_26 = arith.constant dense<0xFF800000> : vector<8xf32>
    %40 = vector.multi_reduction <maximumf>, %37, %cst_26 [1] : vector<8x8xf32> to vector<8xf32>
    %41 = vector.shape_cast %40 : vector<8xf32> to vector<8x1xf32>
    %42 = arith.maximumf %39, %41 : vector<8x1xf32>
    %43 = vector.broadcast %42 : vector<8x1xf32> to vector<8x8xf32>
    %44 = arith.subf %33, %43 : vector<8x8xf32>
    %45 = math.exp %44 : vector<8x8xf32>
    %46 = vector.broadcast %42 : vector<8x1xf32> to vector<8x8xf32>
    %47 = arith.subf %37, %46 : vector<8x8xf32>
    %48 = math.exp %47 : vector<8x8xf32>
    %cst_27 = arith.constant dense<0.000000e+00> : vector<8xf32>
    %49 = vector.multi_reduction <add>, %45, %cst_27 [1] : vector<8x8xf32> to vector<8xf32>
    %50 = vector.shape_cast %49 : vector<8xf32> to vector<8x1xf32>
    %cst_28 = arith.constant dense<0.000000e+00> : vector<8xf32>
    %51 = vector.multi_reduction <add>, %48, %cst_28 [1] : vector<8x8xf32> to vector<8xf32>
    %52 = vector.shape_cast %51 : vector<8xf32> to vector<8x1xf32>
    %53 = arith.addf %50, %52 : vector<8x1xf32>
    %54 = tpu.reciprocal %53 {approx = true} : vector<8x1xf32> -> vector<8x1xf32>
    %55 = arith.truncf %45 : vector<8x8xf32> to vector<8x8xbf16>
    %cst_29 = arith.constant dense<0.000000e+00> : vector<8x32xf32>
    %56 = tpu.matmul %55, %7, %cst_29 {dimension_numbers = #tpu.dot_dimension_numbers<[1], [0], [0], [1], [0, 0, 1, 1], [], []>} : vector<8x8xbf16>, vector<8x32xbf16>, vector<8x32xf32> -> vector<8x32xf32>
    %57 = arith.truncf %48 : vector<8x8xf32> to vector<8x8xbf16>
    %c0_30 = arith.constant 0 : index
    %c0_31 = arith.constant 0 : index
    %58 = vector.load %arg9[%c0_30, %c0_31] : memref<8x32xbf16, #tpu.memory_space<vmem>>, vector<8x32xbf16>
    %cst_32 = arith.constant dense<0.000000e+00> : vector<8x32xf32>
    %59 = tpu.matmul %57, %58, %cst_32 {dimension_numbers = #tpu.dot_dimension_numbers<[1], [0], [0], [1], [0, 0, 1, 1], [], []>} : vector<8x8xbf16>, vector<8x32xbf16>, vector<8x32xf32> -> vector<8x32xf32>
    %60 = arith.addf %56, %59 : vector<8x32xf32>
    %61 = vector.broadcast %54 : vector<8x1xf32> to vector<8x32xf32>
    %62 = arith.mulf %60, %61 : vector<8x32xf32>
    %c0_33 = arith.constant 0 : index
    %c0_34 = arith.constant 0 : index
    %63 = vector.load %arg10[%c0_33, %c0_34] : memref<32x32xbf16, #tpu.memory_space<vmem>>, vector<32x32xbf16>
    %cst_35 = arith.constant dense<0.000000e+00> : vector<8x32xf32>
    %64 = tpu.matmul %7, %63, %cst_35 {dimension_numbers = #tpu.dot_dimension_numbers<[1], [0], [0], [1], [0, 0, 1, 1], [], []>} : vector<8x32xbf16>, vector<32x32xbf16>, vector<8x32xf32> -> vector<8x32xf32>
    %c0_36 = arith.constant 0 : index
    %c0_37 = arith.constant 0 : index
    %65 = vector.load %arg11[%c0_36, %c0_37] : memref<1x32xf32, #tpu.memory_space<vmem>>, vector<1x32xf32>
    %66 = vector.broadcast %65 : vector<1x32xf32> to vector<8x32xf32>
    %67 = arith.addf %64, %66 : vector<8x32xf32>
    %68 = arith.truncf %67 : vector<8x32xf32> to vector<8x32xbf16>
    %c0_38 = arith.constant 0 : index
    %c0_39 = arith.constant 0 : index
    %69 = vector.load %arg12[%c0_38, %c0_39] : memref<32x56xbf16, #tpu.memory_space<vmem>>, vector<32x56xbf16>
    %cst_40 = arith.constant dense<0.000000e+00> : vector<8x56xf32>
    %70 = tpu.matmul %68, %69, %cst_40 {dimension_numbers = #tpu.dot_dimension_numbers<[1], [0], [0], [1], [0, 0, 1, 1], [], []>} : vector<8x32xbf16>, vector<32x56xbf16>, vector<8x56xf32> -> vector<8x56xf32>
    %cst_41 = arith.constant 0.176776692 : f32
    %71 = vector.broadcast %cst_41 : f32 to vector<8x56xf32>
    %72 = arith.mulf %70, %71 : vector<8x56xf32>
    %73 = tpu.iota {dimensions = array<i32: 1>} : vector<1x56xi32>
    %cst_42 = arith.constant 0.000000e+00 : f32
    %74 = vector.broadcast %cst_42 : f32 to vector<8x56xf32>
    %c0_i32 = arith.constant 0 : i32
    %75 = vector.broadcast %c0_i32 : i32 to vector<1x56xi32>
    %76 = arith.cmpi sge, %73, %75 : vector<1x56xi32>
    %c32_i32 = arith.constant 32 : i32
    %77 = vector.broadcast %c32_i32 : i32 to vector<1x56xi32>
    %78 = arith.cmpi slt, %73, %77 : vector<1x56xi32>
    %79 = arith.andi %76, %78 : vector<1x56xi1>
    %cst_43 = arith.constant 0xFF800000 : f32
    %80 = vector.shape_cast %79 : vector<1x56xi1> to vector<1x56xi1>
    %81 = vector.broadcast %80 : vector<1x56xi1> to vector<8x56xi1>
    %82 = vector.broadcast %cst_43 : f32 to vector<8x56xf32>
    %83 = arith.select %81, %72, %82 : vector<8x56xi1>, vector<8x56xf32>
    %cst_44 = arith.constant dense<0xFF800000> : vector<8xf32>
    %84 = vector.multi_reduction <maximumf>, %83, %cst_44 [1] : vector<8x56xf32> to vector<8xf32>
    %85 = vector.shape_cast %84 : vector<8xf32> to vector<8x1xf32>
    %86 = vector.broadcast %85 : vector<8x1xf32> to vector<8x56xf32>
    %87 = arith.subf %83, %86 : vector<8x56xf32>
    %88 = math.exp %87 : vector<8x56xf32>
    %cst_45 = arith.constant dense<0.000000e+00> : vector<8xf32>
    %89 = vector.multi_reduction <add>, %88, %cst_45 [1] : vector<8x56xf32> to vector<8xf32>
    %90 = vector.shape_cast %89 : vector<8xf32> to vector<8x1xf32>
    %91 = tpu.reciprocal %90 {approx = true} : vector<8x1xf32> -> vector<8x1xf32>
    %92 = vector.broadcast %91 : vector<8x1xf32> to vector<8x56xf32>
    %93 = arith.mulf %88, %92 : vector<8x56xf32>
    %94 = arith.addf %74, %93 : vector<8x56xf32>
    %c32_i32_46 = arith.constant 32 : i32
    %95 = vector.broadcast %c32_i32_46 : i32 to vector<1x56xi32>
    %96 = arith.cmpi sge, %73, %95 : vector<1x56xi32>
    %c48_i32 = arith.constant 48 : i32
    %97 = vector.broadcast %c48_i32 : i32 to vector<1x56xi32>
    %98 = arith.cmpi slt, %73, %97 : vector<1x56xi32>
    %99 = arith.andi %96, %98 : vector<1x56xi1>
    %cst_47 = arith.constant 0xFF800000 : f32
    %100 = vector.shape_cast %99 : vector<1x56xi1> to vector<1x56xi1>
    %101 = vector.broadcast %100 : vector<1x56xi1> to vector<8x56xi1>
    %102 = vector.broadcast %cst_47 : f32 to vector<8x56xf32>
    %103 = arith.select %101, %72, %102 : vector<8x56xi1>, vector<8x56xf32>
    %cst_48 = arith.constant dense<0xFF800000> : vector<8xf32>
    %104 = vector.multi_reduction <maximumf>, %103, %cst_48 [1] : vector<8x56xf32> to vector<8xf32>
    %105 = vector.shape_cast %104 : vector<8xf32> to vector<8x1xf32>
    %106 = vector.broadcast %105 : vector<8x1xf32> to vector<8x56xf32>
    %107 = arith.subf %103, %106 : vector<8x56xf32>
    %108 = math.exp %107 : vector<8x56xf32>
    %cst_49 = arith.constant dense<0.000000e+00> : vector<8xf32>
    %109 = vector.multi_reduction <add>, %108, %cst_49 [1] : vector<8x56xf32> to vector<8xf32>
    %110 = vector.shape_cast %109 : vector<8xf32> to vector<8x1xf32>
    %111 = tpu.reciprocal %110 {approx = true} : vector<8x1xf32> -> vector<8x1xf32>
    %112 = vector.broadcast %111 : vector<8x1xf32> to vector<8x56xf32>
    %113 = arith.mulf %108, %112 : vector<8x56xf32>
    %114 = arith.addf %94, %113 : vector<8x56xf32>
    %c48_i32_50 = arith.constant 48 : i32
    %115 = vector.broadcast %c48_i32_50 : i32 to vector<1x56xi32>
    %116 = arith.cmpi sge, %73, %115 : vector<1x56xi32>
    %c56_i32 = arith.constant 56 : i32
    %117 = vector.broadcast %c56_i32 : i32 to vector<1x56xi32>
    %118 = arith.cmpi slt, %73, %117 : vector<1x56xi32>
    %119 = arith.andi %116, %118 : vector<1x56xi1>
    %cst_51 = arith.constant 0xFF800000 : f32
    %120 = vector.shape_cast %119 : vector<1x56xi1> to vector<1x56xi1>
    %121 = vector.broadcast %120 : vector<1x56xi1> to vector<8x56xi1>
    %122 = vector.broadcast %cst_51 : f32 to vector<8x56xf32>
    %123 = arith.select %121, %72, %122 : vector<8x56xi1>, vector<8x56xf32>
    %cst_52 = arith.constant dense<0xFF800000> : vector<8xf32>
    %124 = vector.multi_reduction <maximumf>, %123, %cst_52 [1] : vector<8x56xf32> to vector<8xf32>
    %125 = vector.shape_cast %124 : vector<8xf32> to vector<8x1xf32>
    %126 = vector.broadcast %125 : vector<8x1xf32> to vector<8x56xf32>
    %127 = arith.subf %123, %126 : vector<8x56xf32>
    %128 = math.exp %127 : vector<8x56xf32>
    %cst_53 = arith.constant dense<0.000000e+00> : vector<8xf32>
    %129 = vector.multi_reduction <add>, %128, %cst_53 [1] : vector<8x56xf32> to vector<8xf32>
    %130 = vector.shape_cast %129 : vector<8xf32> to vector<8x1xf32>
    %131 = tpu.reciprocal %130 {approx = true} : vector<8x1xf32> -> vector<8x1xf32>
    %132 = vector.broadcast %131 : vector<8x1xf32> to vector<8x56xf32>
    %133 = arith.mulf %128, %132 : vector<8x56xf32>
    %134 = arith.addf %114, %133 : vector<8x56xf32>
    %cst_54 = arith.constant 0.333333343 : f32
    %135 = vector.broadcast %cst_54 : f32 to vector<8x56xf32>
    %136 = arith.mulf %134, %135 : vector<8x56xf32>
    %137 = arith.truncf %136 : vector<8x56xf32> to vector<8x56xbf16>
    %c0_55 = arith.constant 0 : index
    %c0_56 = arith.constant 0 : index
    %138 = vector.load %arg13[%c0_55, %c0_56] : memref<56x32xbf16, #tpu.memory_space<vmem>>, vector<56x32xbf16>
    %cst_57 = arith.constant dense<0.000000e+00> : vector<8x32xf32>
    %139 = tpu.matmul %137, %138, %cst_57 {dimension_numbers = #tpu.dot_dimension_numbers<[1], [0], [0], [1], [0, 0, 1, 1], [], []>} : vector<8x56xbf16>, vector<56x32xbf16>, vector<8x32xf32> -> vector<8x32xf32>
    %c0_58 = arith.constant 0 : index
    %c0_59 = arith.constant 0 : index
    %140 = vector.load %arg14[%c0_58, %c0_59] : memref<32x32xbf16, #tpu.memory_space<vmem>>, vector<32x32xbf16>
    %cst_60 = arith.constant dense<0.000000e+00> : vector<8x32xf32>
    %141 = tpu.matmul %7, %140, %cst_60 {dimension_numbers = #tpu.dot_dimension_numbers<[1], [0], [0], [1], [0, 0, 1, 1], [], []>} : vector<8x32xbf16>, vector<32x32xbf16>, vector<8x32xf32> -> vector<8x32xf32>
    %c0_61 = arith.constant 0 : index
    %c0_62 = arith.constant 0 : index
    %142 = vector.load %arg15[%c0_61, %c0_62] : memref<1x32xf32, #tpu.memory_space<vmem>>, vector<1x32xf32>
    %143 = vector.broadcast %142 : vector<1x32xf32> to vector<8x32xf32>
    %144 = arith.addf %141, %143 : vector<8x32xf32>
    %145 = arith.truncf %144 : vector<8x32xf32> to vector<8x32xbf16>
    %c0_63 = arith.constant 0 : index
    %c0_64 = arith.constant 0 : index
    %146 = vector.load %arg16[%c0_63, %c0_64] : memref<32x32xbf16, #tpu.memory_space<vmem>>, vector<32x32xbf16>
    %cst_65 = arith.constant dense<0.000000e+00> : vector<8x32xf32>
    %147 = tpu.matmul %145, %146, %cst_65 {dimension_numbers = #tpu.dot_dimension_numbers<[1], [0], [0], [1], [0, 0, 1, 1], [], []>} : vector<8x32xbf16>, vector<32x32xbf16>, vector<8x32xf32> -> vector<8x32xf32>
    %cst_66 = arith.constant 0.176776692 : f32
    %148 = vector.broadcast %cst_66 : f32 to vector<8x32xf32>
    %149 = arith.mulf %147, %148 : vector<8x32xf32>
    %150 = tpu.iota {dimensions = array<i32: 1>} : vector<1x32xi32>
    %cst_67 = arith.constant 0.000000e+00 : f32
    %151 = vector.broadcast %cst_67 : f32 to vector<8x32xf32>
    %c0_i32_68 = arith.constant 0 : i32
    %152 = vector.broadcast %c0_i32_68 : i32 to vector<1x32xi32>
    %153 = arith.cmpi sge, %150, %152 : vector<1x32xi32>
    %c8_i32 = arith.constant 8 : i32
    %154 = vector.broadcast %c8_i32 : i32 to vector<1x32xi32>
    %155 = arith.cmpi slt, %150, %154 : vector<1x32xi32>
    %156 = arith.andi %153, %155 : vector<1x32xi1>
    %cst_69 = arith.constant 0xFF800000 : f32
    %157 = vector.shape_cast %156 : vector<1x32xi1> to vector<1x32xi1>
    %158 = vector.broadcast %157 : vector<1x32xi1> to vector<8x32xi1>
    %159 = vector.broadcast %cst_69 : f32 to vector<8x32xf32>
    %160 = arith.select %158, %149, %159 : vector<8x32xi1>, vector<8x32xf32>
    %cst_70 = arith.constant dense<0xFF800000> : vector<8xf32>
    %161 = vector.multi_reduction <maximumf>, %160, %cst_70 [1] : vector<8x32xf32> to vector<8xf32>
    %162 = vector.shape_cast %161 : vector<8xf32> to vector<8x1xf32>
    %163 = vector.broadcast %162 : vector<8x1xf32> to vector<8x32xf32>
    %164 = arith.subf %160, %163 : vector<8x32xf32>
    %165 = math.exp %164 : vector<8x32xf32>
    %cst_71 = arith.constant dense<0.000000e+00> : vector<8xf32>
    %166 = vector.multi_reduction <add>, %165, %cst_71 [1] : vector<8x32xf32> to vector<8xf32>
    %167 = vector.shape_cast %166 : vector<8xf32> to vector<8x1xf32>
    %168 = tpu.reciprocal %167 {approx = true} : vector<8x1xf32> -> vector<8x1xf32>
    %169 = vector.broadcast %168 : vector<8x1xf32> to vector<8x32xf32>
    %170 = arith.mulf %165, %169 : vector<8x32xf32>
    %171 = arith.addf %151, %170 : vector<8x32xf32>
    %c8_i32_72 = arith.constant 8 : i32
    %172 = vector.broadcast %c8_i32_72 : i32 to vector<1x32xi32>
    %173 = arith.cmpi sge, %150, %172 : vector<1x32xi32>
    %c16_i32 = arith.constant 16 : i32
    %174 = vector.broadcast %c16_i32 : i32 to vector<1x32xi32>
    %175 = arith.cmpi slt, %150, %174 : vector<1x32xi32>
    %176 = arith.andi %173, %175 : vector<1x32xi1>
    %cst_73 = arith.constant 0xFF800000 : f32
    %177 = vector.shape_cast %176 : vector<1x32xi1> to vector<1x32xi1>
    %178 = vector.broadcast %177 : vector<1x32xi1> to vector<8x32xi1>
    %179 = vector.broadcast %cst_73 : f32 to vector<8x32xf32>
    %180 = arith.select %178, %149, %179 : vector<8x32xi1>, vector<8x32xf32>
    %cst_74 = arith.constant dense<0xFF800000> : vector<8xf32>
    %181 = vector.multi_reduction <maximumf>, %180, %cst_74 [1] : vector<8x32xf32> to vector<8xf32>
    %182 = vector.shape_cast %181 : vector<8xf32> to vector<8x1xf32>
    %183 = vector.broadcast %182 : vector<8x1xf32> to vector<8x32xf32>
    %184 = arith.subf %180, %183 : vector<8x32xf32>
    %185 = math.exp %184 : vector<8x32xf32>
    %cst_75 = arith.constant dense<0.000000e+00> : vector<8xf32>
    %186 = vector.multi_reduction <add>, %185, %cst_75 [1] : vector<8x32xf32> to vector<8xf32>
    %187 = vector.shape_cast %186 : vector<8xf32> to vector<8x1xf32>
    %188 = tpu.reciprocal %187 {approx = true} : vector<8x1xf32> -> vector<8x1xf32>
    %189 = vector.broadcast %188 : vector<8x1xf32> to vector<8x32xf32>
    %190 = arith.mulf %185, %189 : vector<8x32xf32>
    %191 = arith.addf %171, %190 : vector<8x32xf32>
    %c16_i32_76 = arith.constant 16 : i32
    %192 = vector.broadcast %c16_i32_76 : i32 to vector<1x32xi32>
    %193 = arith.cmpi sge, %150, %192 : vector<1x32xi32>
    %c24_i32 = arith.constant 24 : i32
    %194 = vector.broadcast %c24_i32 : i32 to vector<1x32xi32>
    %195 = arith.cmpi slt, %150, %194 : vector<1x32xi32>
    %196 = arith.andi %193, %195 : vector<1x32xi1>
    %cst_77 = arith.constant 0xFF800000 : f32
    %197 = vector.shape_cast %196 : vector<1x32xi1> to vector<1x32xi1>
    %198 = vector.broadcast %197 : vector<1x32xi1> to vector<8x32xi1>
    %199 = vector.broadcast %cst_77 : f32 to vector<8x32xf32>
    %200 = arith.select %198, %149, %199 : vector<8x32xi1>, vector<8x32xf32>
    %cst_78 = arith.constant dense<0xFF800000> : vector<8xf32>
    %201 = vector.multi_reduction <maximumf>, %200, %cst_78 [1] : vector<8x32xf32> to vector<8xf32>
    %202 = vector.shape_cast %201 : vector<8xf32> to vector<8x1xf32>
    %203 = vector.broadcast %202 : vector<8x1xf32> to vector<8x32xf32>
    %204 = arith.subf %200, %203 : vector<8x32xf32>
    %205 = math.exp %204 : vector<8x32xf32>
    %cst_79 = arith.constant dense<0.000000e+00> : vector<8xf32>
    %206 = vector.multi_reduction <add>, %205, %cst_79 [1] : vector<8x32xf32> to vector<8xf32>
    %207 = vector.shape_cast %206 : vector<8xf32> to vector<8x1xf32>
    %208 = tpu.reciprocal %207 {approx = true} : vector<8x1xf32> -> vector<8x1xf32>
    %209 = vector.broadcast %208 : vector<8x1xf32> to vector<8x32xf32>
    %210 = arith.mulf %205, %209 : vector<8x32xf32>
    %211 = arith.addf %191, %210 : vector<8x32xf32>
    %c24_i32_80 = arith.constant 24 : i32
    %212 = vector.broadcast %c24_i32_80 : i32 to vector<1x32xi32>
    %213 = arith.cmpi sge, %150, %212 : vector<1x32xi32>
    %c32_i32_81 = arith.constant 32 : i32
    %214 = vector.broadcast %c32_i32_81 : i32 to vector<1x32xi32>
    %215 = arith.cmpi slt, %150, %214 : vector<1x32xi32>
    %216 = arith.andi %213, %215 : vector<1x32xi1>
    %cst_82 = arith.constant 0xFF800000 : f32
    %217 = vector.shape_cast %216 : vector<1x32xi1> to vector<1x32xi1>
    %218 = vector.broadcast %217 : vector<1x32xi1> to vector<8x32xi1>
    %219 = vector.broadcast %cst_82 : f32 to vector<8x32xf32>
    %220 = arith.select %218, %149, %219 : vector<8x32xi1>, vector<8x32xf32>
    %cst_83 = arith.constant dense<0xFF800000> : vector<8xf32>
    %221 = vector.multi_reduction <maximumf>, %220, %cst_83 [1] : vector<8x32xf32> to vector<8xf32>
    %222 = vector.shape_cast %221 : vector<8xf32> to vector<8x1xf32>
    %223 = vector.broadcast %222 : vector<8x1xf32> to vector<8x32xf32>
    %224 = arith.subf %220, %223 : vector<8x32xf32>
    %225 = math.exp %224 : vector<8x32xf32>
    %cst_84 = arith.constant dense<0.000000e+00> : vector<8xf32>
    %226 = vector.multi_reduction <add>, %225, %cst_84 [1] : vector<8x32xf32> to vector<8xf32>
    %227 = vector.shape_cast %226 : vector<8xf32> to vector<8x1xf32>
    %228 = tpu.reciprocal %227 {approx = true} : vector<8x1xf32> -> vector<8x1xf32>
    %229 = vector.broadcast %228 : vector<8x1xf32> to vector<8x32xf32>
    %230 = arith.mulf %225, %229 : vector<8x32xf32>
    %231 = arith.addf %211, %230 : vector<8x32xf32>
    %cst_85 = arith.constant 2.500000e-01 : f32
    %232 = vector.broadcast %cst_85 : f32 to vector<8x32xf32>
    %233 = arith.mulf %231, %232 : vector<8x32xf32>
    %234 = arith.truncf %233 : vector<8x32xf32> to vector<8x32xbf16>
    %c0_86 = arith.constant 0 : index
    %c0_87 = arith.constant 0 : index
    %235 = vector.load %arg17[%c0_86, %c0_87] : memref<32x32xbf16, #tpu.memory_space<vmem>>, vector<32x32xbf16>
    %cst_88 = arith.constant dense<0.000000e+00> : vector<8x32xf32>
    %236 = tpu.matmul %234, %235, %cst_88 {dimension_numbers = #tpu.dot_dimension_numbers<[1], [0], [0], [1], [0, 0, 1, 1], [], []>} : vector<8x32xbf16>, vector<32x32xbf16>, vector<8x32xf32> -> vector<8x32xf32>
    %237 = arith.truncf %30 : vector<8x32xf32> to vector<8x32xbf16>
    %c0_89 = arith.constant 0 : index
    %c0_90 = arith.constant 0 : index
    %238 = vector.load %arg18[%c0_89, %c0_90] : memref<32x64xbf16, #tpu.memory_space<vmem>>, vector<32x64xbf16>
    %cst_91 = arith.constant dense<0.000000e+00> : vector<8x64xf32>
    %239 = tpu.matmul %237, %238, %cst_91 {dimension_numbers = #tpu.dot_dimension_numbers<[1], [0], [0], [1], [0, 0, 1, 1], [], []>} : vector<8x32xbf16>, vector<32x64xbf16>, vector<8x64xf32> -> vector<8x64xf32>
    %240 = arith.truncf %62 : vector<8x32xf32> to vector<8x32xbf16>
    %c0_92 = arith.constant 0 : index
    %c0_93 = arith.constant 0 : index
    %241 = vector.load %arg19[%c0_92, %c0_93] : memref<32x64xbf16, #tpu.memory_space<vmem>>, vector<32x64xbf16>
    %cst_94 = arith.constant dense<0.000000e+00> : vector<8x64xf32>
    %242 = tpu.matmul %240, %241, %cst_94 {dimension_numbers = #tpu.dot_dimension_numbers<[1], [0], [0], [1], [0, 0, 1, 1], [], []>} : vector<8x32xbf16>, vector<32x64xbf16>, vector<8x64xf32> -> vector<8x64xf32>
    %243 = arith.addf %239, %242 : vector<8x64xf32>
    %244 = arith.truncf %139 : vector<8x32xf32> to vector<8x32xbf16>
    %c0_95 = arith.constant 0 : index
    %c0_96 = arith.constant 0 : index
    %245 = vector.load %arg20[%c0_95, %c0_96] : memref<32x64xbf16, #tpu.memory_space<vmem>>, vector<32x64xbf16>
    %cst_97 = arith.constant dense<0.000000e+00> : vector<8x64xf32>
    %246 = tpu.matmul %244, %245, %cst_97 {dimension_numbers = #tpu.dot_dimension_numbers<[1], [0], [0], [1], [0, 0, 1, 1], [], []>} : vector<8x32xbf16>, vector<32x64xbf16>, vector<8x64xf32> -> vector<8x64xf32>
    %247 = arith.addf %243, %246 : vector<8x64xf32>
    %248 = arith.truncf %236 : vector<8x32xf32> to vector<8x32xbf16>
    %c0_98 = arith.constant 0 : index
    %c0_99 = arith.constant 0 : index
    %249 = vector.load %arg21[%c0_98, %c0_99] : memref<32x64xbf16, #tpu.memory_space<vmem>>, vector<32x64xbf16>
    %cst_100 = arith.constant dense<0.000000e+00> : vector<8x64xf32>
    %250 = tpu.matmul %248, %249, %cst_100 {dimension_numbers = #tpu.dot_dimension_numbers<[1], [0], [0], [1], [0, 0, 1, 1], [], []>} : vector<8x32xbf16>, vector<32x64xbf16>, vector<8x64xf32> -> vector<8x64xf32>
    %251 = arith.addf %247, %250 : vector<8x64xf32>
    %c0_101 = arith.constant 0 : index
    %c0_102 = arith.constant 0 : index
    %252 = vector.load %arg22[%c0_101, %c0_102] : memref<1x64xf32, #tpu.memory_space<vmem>>, vector<1x64xf32>
    %253 = vector.broadcast %252 : vector<1x64xf32> to vector<8x64xf32>
    %254 = arith.addf %251, %253 : vector<8x64xf32>
    %cst_103 = arith.constant 0.000000e+00 : f32
    %255 = vector.broadcast %cst_103 : f32 to vector<8x64xf32>
    %256 = arith.maximumf %254, %255 : vector<8x64xf32>
    %257 = arith.truncf %256 : vector<8x64xf32> to vector<8x64xbf16>
    %c0_104 = arith.constant 0 : index
    %c0_105 = arith.constant 0 : index
    %258 = vector.load %arg23[%c0_104, %c0_105] : memref<64x128xbf16, #tpu.memory_space<vmem>>, vector<64x128xbf16>
    %cst_106 = arith.constant dense<0.000000e+00> : vector<8x128xf32>
    %259 = tpu.matmul %257, %258, %cst_106 {dimension_numbers = #tpu.dot_dimension_numbers<[1], [0], [0], [1], [0, 0, 1, 1], [], []>} : vector<8x64xbf16>, vector<64x128xbf16>, vector<8x128xf32> -> vector<8x128xf32>
    %c0_107 = arith.constant 0 : index
    %c0_108 = arith.constant 0 : index
    %260 = vector.load %arg24[%c0_107, %c0_108] : memref<1x128xf32, #tpu.memory_space<vmem>>, vector<1x128xf32>
    %261 = vector.broadcast %260 : vector<1x128xf32> to vector<8x128xf32>
    %262 = arith.addf %259, %261 : vector<8x128xf32>
    %c0_109 = arith.constant 0 : index
    %c0_110 = arith.constant 0 : index
    %263 = vector.load %arg25[%c0_109, %c0_110] : memref<8x128xf32, #tpu.memory_space<vmem>>, vector<8x128xf32>
    tpu.vector_store %arg25[%c0_109, %c0_110], %262 {strides = array<i32>} : memref<8x128xf32, #tpu.memory_space<vmem>>, vector<8x128xf32>,
    return
  }
  func.func @transform_0(%arg0: i32) -> (i32, i32) {
    %c0_i32 = arith.constant 0 : i32
    %c0_i32_0 = arith.constant 0 : i32
    return %arg0, %c0_i32 : i32, i32
  }
  func.func @transform_1(%arg0: i32) -> (i32, i32) {
    %c0_i32 = arith.constant 0 : i32
    %c0_i32_0 = arith.constant 0 : i32
    %c0_i32_1 = arith.constant 0 : i32
    return %c0_i32, %c0_i32_0 : i32, i32
  }
  func.func @transform_2(%arg0: i32) -> (i32, i32) {
    %c0_i32 = arith.constant 0 : i32
    %c0_i32_0 = arith.constant 0 : i32
    %c0_i32_1 = arith.constant 0 : i32
    return %c0_i32, %c0_i32_0 : i32, i32
  }
  func.func @transform_3(%arg0: i32) -> (i32, i32) {
    %c0_i32 = arith.constant 0 : i32
    %c0_i32_0 = arith.constant 0 : i32
    %c0_i32_1 = arith.constant 0 : i32
    return %c0_i32, %c0_i32_0 : i32, i32
  }
  func.func @transform_4(%arg0: i32) -> (i32, i32) {
    %c0_i32 = arith.constant 0 : i32
    %c0_i32_0 = arith.constant 0 : i32
    %c0_i32_1 = arith.constant 0 : i32
    return %c0_i32, %c0_i32_0 : i32, i32
  }
  func.func @transform_5(%arg0: i32) -> (i32, i32) {
    %c0_i32 = arith.constant 0 : i32
    %c0_i32_0 = arith.constant 0 : i32
    %c0_i32_1 = arith.constant 0 : i32
    return %c0_i32, %c0_i32_0 : i32, i32
  }
  func.func @transform_6(%arg0: i32) -> (i32, i32) {
    %c0_i32 = arith.constant 0 : i32
    %c0_i32_0 = arith.constant 0 : i32
    %c0_i32_1 = arith.constant 0 : i32
    return %c0_i32, %c0_i32_0 : i32, i32
  }
  func.func @transform_7(%arg0: i32) -> (i32, i32) {
    %c0_i32 = arith.constant 0 : i32
    %c0_i32_0 = arith.constant 0 : i32
    %c0_i32_1 = arith.constant 0 : i32
    return %c0_i32, %c0_i32_0 : i32, i32
  }
  func.func @transform_8(%arg0: i32) -> (i32, i32) {
    %c0_i32 = arith.constant 0 : i32
    %c0_i32_0 = arith.constant 0 : i32
    %c0_i32_1 = arith.constant 0 : i32
    return %c0_i32, %c0_i32_0 : i32, i32
  }
  func.func @transform_9(%arg0: i32) -> (i32, i32) {
    %c0_i32 = arith.constant 0 : i32
    %c0_i32_0 = arith.constant 0 : i32
    %c0_i32_1 = arith.constant 0 : i32
    return %c0_i32, %c0_i32_0 : i32, i32
  }
  func.func @transform_10(%arg0: i32) -> (i32, i32) {
    %c0_i32 = arith.constant 0 : i32
    %c0_i32_0 = arith.constant 0 : i32
    %c0_i32_1 = arith.constant 0 : i32
    return %c0_i32, %c0_i32_0 : i32, i32
  }
  func.func @transform_11(%arg0: i32) -> (i32, i32) {
    %c0_i32 = arith.constant 0 : i32
    %c0_i32_0 = arith.constant 0 : i32
    %c0_i32_1 = arith.constant 0 : i32
    return %c0_i32, %c0_i32_0 : i32, i32
  }
  func.func @transform_12(%arg0: i32) -> (i32, i32) {
    %c0_i32 = arith.constant 0 : i32
    %c0_i32_0 = arith.constant 0 : i32
    %c0_i32_1 = arith.constant 0 : i32
    return %c0_i32, %c0_i32_0 : i32, i32
  }
  func.func @transform_13(%arg0: i32) -> (i32, i32) {
    %c0_i32 = arith.constant 0 : i32
    %c0_i32_0 = arith.constant 0 : i32
    %c0_i32_1 = arith.constant 0 : i32
    return %c0_i32, %c0_i32_0 : i32, i32
  }
  func.func @transform_14(%arg0: i32) -> (i32, i32) {
    %c0_i32 = arith.constant 0 : i32
    %c0_i32_0 = arith.constant 0 : i32
    %c0_i32_1 = arith.constant 0 : i32
    return %c0_i32, %c0_i32_0 : i32, i32
  }
  func.func @transform_15(%arg0: i32) -> (i32, i32) {
    %c0_i32 = arith.constant 0 : i32
    %c0_i32_0 = arith.constant 0 : i32
    %c0_i32_1 = arith.constant 0 : i32
    return %c0_i32, %c0_i32_0 : i32, i32
  }
  func.func @transform_16(%arg0: i32) -> (i32, i32) {
    %c0_i32 = arith.constant 0 : i32
    %c0_i32_0 = arith.constant 0 : i32
    %c0_i32_1 = arith.constant 0 : i32
    return %c0_i32, %c0_i32_0 : i32, i32
  }
  func.func @transform_17(%arg0: i32) -> (i32, i32) {
    %c0_i32 = arith.constant 0 : i32
    %c0_i32_0 = arith.constant 0 : i32
    %c0_i32_1 = arith.constant 0 : i32
    return %c0_i32, %c0_i32_0 : i32, i32
  }
  func.func @transform_18(%arg0: i32) -> (i32, i32) {
    %c0_i32 = arith.constant 0 : i32
    %c0_i32_0 = arith.constant 0 : i32
    %c0_i32_1 = arith.constant 0 : i32
    return %c0_i32, %c0_i32_0 : i32, i32
  }
  func.func @transform_19(%arg0: i32) -> (i32, i32) {
    %c0_i32 = arith.constant 0 : i32
    %c0_i32_0 = arith.constant 0 : i32
    %c0_i32_1 = arith.constant 0 : i32
    return %c0_i32, %c0_i32_0 : i32, i32
  }
  func.func @transform_20(%arg0: i32) -> (i32, i32) {
    %c0_i32 = arith.constant 0 : i32
    %c0_i32_0 = arith.constant 0 : i32
    %c0_i32_1 = arith.constant 0 : i32
    return %c0_i32, %c0_i32_0 : i32, i32
  }
  func.func @transform_21(%arg0: i32) -> (i32, i32) {
    %c0_i32 = arith.constant 0 : i32
    %c0_i32_0 = arith.constant 0 : i32
    %c0_i32_1 = arith.constant 0 : i32
    return %c0_i32, %c0_i32_0 : i32, i32
  }
  func.func @transform_22(%arg0: i32) -> (i32, i32) {
    %c0_i32 = arith.constant 0 : i32
    %c0_i32_0 = arith.constant 0 : i32
    %c0_i32_1 = arith.constant 0 : i32
    return %c0_i32, %c0_i32_0 : i32, i32
  }
  func.func @transform_23(%arg0: i32) -> (i32, i32) {
    %c0_i32 = arith.constant 0 : i32
    %c0_i32_0 = arith.constant 0 : i32
    %c0_i32_1 = arith.constant 0 : i32
    return %c0_i32, %c0_i32_0 : i32, i32
  }
  func.func @transform_24(%arg0: i32) -> (i32, i32) {
    %c0_i32 = arith.constant 0 : i32
    %c0_i32_0 = arith.constant 0 : i32
    return %arg0, %c0_i32 : i32, i32
  }
}

</mosaic_0001>

<llo_original>
// kernel: tpu_custom_call.1
$region0: #{tpu_custom_call.1}
  #allocation0 [shape = 'u32[]', space=smem, size = 0x4, offset = 0x4, fixed_abs, tag = 'smem constant byte address 0x4 - core index']
  #allocation1 [shape = 'u32[144,128]{1,0:T(1,128)}', space=vmem, size = 0x12000, scoped, tag = 'internal scratch']
  %s0 = inlined_call_operand.hbm [shape: f32[8,16], index: 0, kind: input, shape index: {}]
  %s1 = inlined_call_operand.hbm [shape: bf16[16,32], index: 1, kind: input, shape index: {}]
  %s2 = inlined_call_operand.hbm [shape: f32[1,32], index: 2, kind: input, shape index: {}]
  %s3 = inlined_call_operand.vmem [shape: bf16[32,32], index: 3, kind: input, shape index: {}]
  %s4 = inlined_call_operand.hbm [shape: f32[1,32], index: 4, kind: input, shape index: {}]
  %s5 = inlined_call_operand.hbm [shape: bf16[32,32], index: 5, kind: input, shape index: {}]
  %s6 = inlined_call_operand.hbm [shape: bf16[32,32], index: 6, kind: input, shape index: {}]
  %s7 = inlined_call_operand.vmem [shape: bf16[32,8], index: 7, kind: input, shape index: {}]
  %s8 = inlined_call_operand.hbm [shape: bf16[8,32], index: 8, kind: input, shape index: {}]
  %s9 = inlined_call_operand.vmem [shape: bf16[32,32], index: 9, kind: input, shape index: {}]
  %s10 = inlined_call_operand.hbm [shape: f32[1,32], index: 10, kind: input, shape index: {}]
  %s11 = inlined_call_operand.hbm [shape: bf16[32,56], index: 11, kind: input, shape index: {}]
  %s12 = inlined_call_operand.vmem [shape: bf16[56,32], index: 12, kind: input, shape index: {}]
  %s13 = inlined_call_operand.hbm [shape: bf16[32,32], index: 13, kind: input, shape index: {}]
  %s14 = inlined_call_operand.hbm [shape: f32[1,32], index: 14, kind: input, shape index: {}]
  %s15 = inlined_call_operand.hbm [shape: bf16[32,32], index: 15, kind: input, shape index: {}]
  %s16 = inlined_call_operand.hbm [shape: bf16[32,32], index: 16, kind: input, shape index: {}]
  %s17 = inlined_call_operand.hbm [shape: bf16[32,64], index: 17, kind: input, shape index: {}]
  %s18 = inlined_call_operand.vmem [shape: bf16[32,64], index: 18, kind: input, shape index: {}]
  %s19 = inlined_call_operand.hbm [shape: bf16[32,64], index: 19, kind: input, shape index: {}]
  %s20 = inlined_call_operand.hbm [shape: bf16[32,64], index: 20, kind: input, shape index: {}]
  %s21 = inlined_call_operand.vmem [shape: f32[1,64], index: 21, kind: input, shape index: {}]
  %s22 = inlined_call_operand.vmem [shape: bf16[64,128], index: 22, kind: input, shape index: {}]
  %s23 = inlined_call_operand.vmem [shape: f32[1,128], index: 23, kind: input, shape index: {}]
  %s24 = inlined_call_operand.hbm [shape: f32[8,128], index: 24, kind: output, shape index: {}]
  %s25 = sld [smem:[#allocation0]]
  $region170: #{tpu_custom_call.1} parent=0
    _
  %s27 = ssub.s32 1, %s25
  %s28 = scalar_select 0, %s27, %s25
  $region1: #{tpu_custom_call.1} parent=0
    #allocation2 [shape = 'u8[4096]{0}', space=vmem, size = 0x1000, scoped, tag = 'input window, operand 0, single buffered']
    #allocation3 [shape = 's32[1]{0}', space=sflag, size = 0x4, scoped, tag = 'scoped memory for tpu_custom_call.1']
    #allocation4 [shape = 's32[1]{0}', space=sflag, size = 0x4, scoped, tag = 'scoped memory for tpu_custom_call.1']
    #allocation5 [shape = 'u8[4096]{0}', space=vmem, size = 0x1000, scoped, tag = 'input window, operand 1, single buffered']
    #allocation6 [shape = 's32[1]{0}', space=sflag, size = 0x4, scoped, tag = 'scoped memory for tpu_custom_call.1']
    #allocation7 [shape = 'u8[512]{0}', space=vmem, size = 0x400, scoped, tag = 'input window, operand 2, single buffered']
    #allocation8 [shape = 'u8[512]{0}', space=vmem, size = 0x400, scoped, tag = 'input window, operand 4, single buffered']
    #allocation9 [shape = 's32[1]{0}', space=sflag, size = 0x4, scoped, tag = 'scoped memory for tpu_custom_call.1']
    #allocation10 [shape = 'u8[8192]{0}', space=vmem, size = 0x2000, scoped, tag = 'input window, operand 5, single buffered']
    #allocation11 [shape = 'u8[8192]{0}', space=vmem, size = 0x2000, scoped, tag = 'input window, operand 6, single buffered']
    #allocation12 [shape = 's32[1]{0}', space=sflag, size = 0x4, scoped, tag = 'scoped memory for tpu_custom_call.1']
    #allocation13 [shape = 'u8[2048]{0}', space=vmem, size = 0x800, scoped, tag = 'input window, operand 8, single buffered']
    #allocation14 [shape = 'u8[512]{0}', space=vmem, size = 0x400, scoped, tag = 'input window, operand 10, single buffered']
    #allocation15 [shape = 's32[1]{0}', space=sflag, size = 0x4, scoped, tag = 'scoped memory for tpu_custom_call.1']
    #allocation16 [shape = 'u8[8192]{0}', space=vmem, size = 0x2000, scoped, tag = 'input window, operand 11, single buffered']
    #allocation17 [shape = 'u8[8192]{0}', space=vmem, size = 0x2000, scoped, tag = 'input window, operand 13, single buffered']
    #allocation18 [shape = 's32[1]{0}', space=sflag, size = 0x4, scoped, tag = 'scoped memory for tpu_custom_call.1']
    #allocation19 [shape = 'u8[512]{0}', space=vmem, size = 0x400, scoped, tag = 'input window, operand 14, single buffered']
    #allocation20 [shape = 'u8[8192]{0}', space=vmem, size = 0x2000, scoped, tag = 'input window, operand 15, single buffered']
    #allocation21 [shape = 's32[1]{0}', space=sflag, size = 0x4, scoped, tag = 'scoped memory for tpu_custom_call.1']
    #allocation22 [shape = 'u8[8192]{0}', space=vmem, size = 0x2000, scoped, tag = 'input window, operand 16, single buffered']
    #allocation23 [shape = 'u8[8192]{0}', space=vmem, size = 0x2000, scoped, tag = 'input window, operand 17, single buffered']
    #allocation24 [shape = 's32[1]{0}', space=sflag, size = 0x4, scoped, tag = 'scoped memory for tpu_custom_call.1']
    #allocation25 [shape = 'u8[8192]{0}', space=vmem, size = 0x2000, scoped, tag = 'input window, operand 19, single buffered']
    #allocation26 [shape = 'u8[8192]{0}', space=vmem, size = 0x2000, scoped, tag = 'input window, operand 20, single buffered']
    #allocation27 [shape = 's32[1]{0}', space=sflag, size = 0x4, scoped, tag = 'scoped memory for tpu_custom_call.1']
    #allocation28 [shape = 'u8[4096]{0}', space=vmem, size = 0x1000, scoped, tag = 'output window, operand 0, single buffered']
    %29 = vsyncpa [#allocation3], 0
    %30 = vsyncpa [#allocation6], 0
    %31 = vsyncpa [#allocation9], 0
    %32 = vsyncpa [#allocation12], 0
    %33 = vsyncpa [#allocation15], 0
    %34 = vsyncpa [#allocation18], 0
    %35 = vsyncpa [#allocation21], 0
    %36 = vsyncpa [#allocation24], 0
    %37 = vsyncpa [#allocation27], 0
    %38 = vsyncpa [#allocation4], 0
    // Predicated region
    $region2: #{tpu_custom_call.1} parent=1 // pred_check
      _
    $region3: #{tpu_custom_call.1} parent=1 // pred_check_branch
      %40 = sbr.rel (0) target = $region5
    $region4: #{tpu_custom_call.1} parent=1 // pred_region
      %s42 = ssub.s32 128, 128
      %43 = vsyncadd [#allocation3], %s42
      %s45 = sshll.u32 [#allocation2], 4
      %s46 = int_to_ptr.vmem [resolvable:$true] %s45
      %48 = dma.hbm_to_vmem [thread:$0]  %s0, 128, %s46, [#allocation3]
    $region5: #{tpu_custom_call.1} parent=1 // pred_fallthru
      _
    // Predicated region
    $region6: #{tpu_custom_call.1} parent=1 // pred_check
      _
    $region7: #{tpu_custom_call.1} parent=1 // pred_check_branch
      %50 = sbr.rel (0) target = $region9
    $region8: #{tpu_custom_call.1} parent=1 // pred_region
      %s52 = ssub.s32 128, 128
      %53 = vsyncadd [#allocation6], %s52
      %s54 = sshll.u32 [#allocation5], 4
      %s55 = int_to_ptr.vmem [resolvable:$true] %s54
      %60 = dma.hbm_to_vmem [thread:$0]  %s1, 128, %s55, [#allocation6], 64, 64, 4
    $region9: #{tpu_custom_call.1} parent=1 // pred_fallthru
      _
    // Predicated region
    $region10: #{tpu_custom_call.1} parent=1 // pred_check
      _
    $region11: #{tpu_custom_call.1} parent=1 // pred_check_branch
      %62 = sbr.rel (0) target = $region13
    $region12: #{tpu_custom_call.1} parent=1 // pred_region
      %s64 = ssub.s32 16, 16
      %65 = vsyncadd [#allocation6], %s64
      %s67 = sshll.u32 [#allocation7], 4
      %s68 = int_to_ptr.vmem [resolvable:$true] %s67
      %70 = dma.hbm_to_vmem [thread:$0]  %s2, 16, %s68, [#allocation6]
    $region13: #{tpu_custom_call.1} parent=1 // pred_fallthru
      _
    // Predicated region
    $region14: #{tpu_custom_call.1} parent=1 // pred_check
      _
    $region15: #{tpu_custom_call.1} parent=1 // pred_check_branch
      %72 = sbr.rel (0) target = $region17
    $region16: #{tpu_custom_call.1} parent=1 // pred_region
      _
    $region17: #{tpu_custom_call.1} parent=1 // pred_fallthru
      _
    // Predicated region
    $region18: #{tpu_custom_call.1} parent=1 // pred_check
      _
    $region19: #{tpu_custom_call.1} parent=1 // pred_check_branch
      %74 = sbr.rel (0) target = $region21
    $region20: #{tpu_custom_call.1} parent=1 // pred_region
      %s76 = ssub.s32 16, 16
      %77 = vsyncadd [#allocation9], %s76
      %s79 = sshll.u32 [#allocation8], 4
      %s80 = int_to_ptr.vmem [resolvable:$true] %s79
      %82 = dma.hbm_to_vmem [thread:$0]  %s4, 16, %s80, [#allocation9]
    $region21: #{tpu_custom_call.1} parent=1 // pred_fallthru
      _
    // Predicated region
    $region22: #{tpu_custom_call.1} parent=1 // pred_check
      _
    $region23: #{tpu_custom_call.1} parent=1 // pred_check_branch
      %84 = sbr.rel (0) target = $region25
    $region24: #{tpu_custom_call.1} parent=1 // pred_region
      %s86 = ssub.s32 256, 256
      %87 = vsyncadd [#allocation9], %s86
      %s88 = sshll.u32 [#allocation10], 4
      %s89 = int_to_ptr.vmem [resolvable:$true] %s88
      %94 = dma.hbm_to_vmem [thread:$0]  %s5, 256, %s89, [#allocation9], 64, 64, 4
    $region25: #{tpu_custom_call.1} parent=1 // pred_fallthru
      _
    // Predicated region
    $region26: #{tpu_custom_call.1} parent=1 // pred_check
      _
    $region27: #{tpu_custom_call.1} parent=1 // pred_check_branch
      %96 = sbr.rel (0) target = $region29
    $region28: #{tpu_custom_call.1} parent=1 // pred_region
      %s98 = ssub.s32 256, 256
      %99 = vsyncadd [#allocation12], %s98
      %s100 = sshll.u32 [#allocation11], 4
      %s101 = int_to_ptr.vmem [resolvable:$true] %s100
      %106 = dma.hbm_to_vmem [thread:$0]  %s6, 256, %s101, [#allocation12], 64, 64, 4
    $region29: #{tpu_custom_call.1} parent=1 // pred_fallthru
      _
    // Predicated region
    $region30: #{tpu_custom_call.1} parent=1 // pred_check
      _
    $region31: #{tpu_custom_call.1} parent=1 // pred_check_branch
      %108 = sbr.rel (0) target = $region33
    $region32: #{tpu_custom_call.1} parent=1 // pred_region
      _
    $region33: #{tpu_custom_call.1} parent=1 // pred_fallthru
      _
    // Predicated region
    $region34: #{tpu_custom_call.1} parent=1 // pred_check
      _
    $region35: #{tpu_custom_call.1} parent=1 // pred_check_branch
      %110 = sbr.rel (0) target = $region37
    $region36: #{tpu_custom_call.1} parent=1 // pred_region
      %s112 = ssub.s32 64, 64
      %113 = vsyncadd [#allocation12], %s112
      %s115 = sshll.u32 [#allocation13], 4
      %s116 = int_to_ptr.vmem [resolvable:$true] %s115
      %118 = dma.hbm_to_vmem [thread:$0]  %s8, 64, %s116, [#allocation12]
    $region37: #{tpu_custom_call.1} parent=1 // pred_fallthru
      _
    // Predicated region
    $region38: #{tpu_custom_call.1} parent=1 // pred_check
      _
    $region39: #{tpu_custom_call.1} parent=1 // pred_check_branch
      %120 = sbr.rel (0) target = $region41
    $region40: #{tpu_custom_call.1} parent=1 // pred_region
      _
    $region41: #{tpu_custom_call.1} parent=1 // pred_fallthru
      _
    // Predicated region
    $region42: #{tpu_custom_call.1} parent=1 // pred_check
      _
    $region43: #{tpu_custom_call.1} parent=1 // pred_check_branch
      %122 = sbr.rel (0) target = $region45
    $region44: #{tpu_custom_call.1} parent=1 // pred_region
      %s124 = ssub.s32 16, 16
      %125 = vsyncadd [#allocation15], %s124
      %s127 = sshll.u32 [#allocation14], 4
      %s128 = int_to_ptr.vmem [resolvable:$true] %s127
      %130 = dma.hbm_to_vmem [thread:$0]  %s10, 16, %s128, [#allocation15]
    $region45: #{tpu_custom_call.1} parent=1 // pred_fallthru
      _
    // Predicated region
    $region46: #{tpu_custom_call.1} parent=1 // pred_check
      _
    $region47: #{tpu_custom_call.1} parent=1 // pred_check_branch
      %132 = sbr.rel (0) target = $region49
    $region48: #{tpu_custom_call.1} parent=1 // pred_region
      %s134 = ssub.s32 256, 256
      %135 = vsyncadd [#allocation15], %s134
      %s136 = sshll.u32 [#allocation16], 4
      %s137 = int_to_ptr.vmem [resolvable:$true] %s136
      %142 = dma.hbm_to_vmem [thread:$0]  %s11, 256, %s137, [#allocation15], 64, 64, 4
    $region49: #{tpu_custom_call.1} parent=1 // pred_fallthru
      _
    // Predicated region
    $region50: #{tpu_custom_call.1} parent=1 // pred_check
      _
    $region51: #{tpu_custom_call.1} parent=1 // pred_check_branch
      %144 = sbr.rel (0) target = $region53
    $region52: #{tpu_custom_call.1} parent=1 // pred_region
      _
    $region53: #{tpu_custom_call.1} parent=1 // pred_fallthru
      _
    // Predicated region
    $region54: #{tpu_custom_call.1} parent=1 // pred_check
      _
    $region55: #{tpu_custom_call.1} parent=1 // pred_check_branch
      %146 = sbr.rel (0) target = $region57
    $region56: #{tpu_custom_call.1} parent=1 // pred_region
      %s148 = ssub.s32 256, 256
      %149 = vsyncadd [#allocation18], %s148
      %s150 = sshll.u32 [#allocation17], 4
      %s151 = int_to_ptr.vmem [resolvable:$true] %s150
      %156 = dma.hbm_to_vmem [thread:$0]  %s13, 256, %s151, [#allocation18], 64, 64, 4
    $region57: #{tpu_custom_call.1} parent=1 // pred_fallthru
      _
    // Predicated region
    $region58: #{tpu_custom_call.1} parent=1 // pred_check
      _
    $region59: #{tpu_custom_call.1} parent=1 // pred_check_branch
      %158 = sbr.rel (0) target = $region61
    $region60: #{tpu_custom_call.1} parent=1 // pred_region
      %s160 = ssub.s32 16, 16
      %161 = vsyncadd [#allocation18], %s160
      %s163 = sshll.u32 [#allocation19], 4
      %s164 = int_to_ptr.vmem [resolvable:$true] %s163
      %166 = dma.hbm_to_vmem [thread:$0]  %s14, 16, %s164, [#allocation18]
    $region61: #{tpu_custom_call.1} parent=1 // pred_fallthru
      _
    // Predicated region
    $region62: #{tpu_custom_call.1} parent=1 // pred_check
      _
    $region63: #{tpu_custom_call.1} parent=1 // pred_check_branch
      %168 = sbr.rel (0) target = $region65
    $region64: #{tpu_custom_call.1} parent=1 // pred_region
      %s170 = ssub.s32 256, 256
      %171 = vsyncadd [#allocation21], %s170
      %s172 = sshll.u32 [#allocation20], 4
      %s173 = int_to_ptr.vmem [resolvable:$true] %s172
      %178 = dma.hbm_to_vmem [thread:$0]  %s15, 256, %s173, [#allocation21], 64, 64, 4
    $region65: #{tpu_custom_call.1} parent=1 // pred_fallthru
      _
    // Predicated region
    $region66: #{tpu_custom_call.1} parent=1 // pred_check
      _
    $region67: #{tpu_custom_call.1} parent=1 // pred_check_branch
      %180 = sbr.rel (0) target = $region69
    $region68: #{tpu_custom_call.1} parent=1 // pred_region
      %s182 = ssub.s32 256, 256
      %183 = vsyncadd [#allocation21], %s182
      %s184 = sshll.u32 [#allocation22], 4
      %s185 = int_to_ptr.vmem [resolvable:$true] %s184
      %190 = dma.hbm_to_vmem [thread:$0]  %s16, 256, %s185, [#allocation21], 64, 64, 4
    $region69: #{tpu_custom_call.1} parent=1 // pred_fallthru
      _
    // Predicated region
    $region70: #{tpu_custom_call.1} parent=1 // pred_check
      _
    $region71: #{tpu_custom_call.1} parent=1 // pred_check_branch
      %192 = sbr.rel (0) target = $region73
    $region72: #{tpu_custom_call.1} parent=1 // pred_region
      %s194 = ssub.s32 256, 256
      %195 = vsyncadd [#allocation24], %s194
      %s196 = sshll.u32 [#allocation23], 4
      %s197 = int_to_ptr.vmem [resolvable:$true] %s196
      %202 = dma.hbm_to_vmem [thread:$0]  %s17, 256, %s197, [#allocation24], 64, 64, 4
    $region73: #{tpu_custom_call.1} parent=1 // pred_fallthru
      _
    // Predicated region
    $region74: #{tpu_custom_call.1} parent=1 // pred_check
      _
    $region75: #{tpu_custom_call.1} parent=1 // pred_check_branch
      %204 = sbr.rel (0) target = $region77
    $region76: #{tpu_custom_call.1} parent=1 // pred_region
      _
    $region77: #{tpu_custom_call.1} parent=1 // pred_fallthru
      _
    // Predicated region
    $region78: #{tpu_custom_call.1} parent=1 // pred_check
      _
    $region79: #{tpu_custom_call.1} parent=1 // pred_check_branch
      %206 = sbr.rel (0) target = $region81
    $region80: #{tpu_custom_call.1} parent=1 // pred_region
      %s208 = ssub.s32 256, 256
      %209 = vsyncadd [#allocation24], %s208
      %s210 = sshll.u32 [#allocation25], 4
      %s211 = int_to_ptr.vmem [resolvable:$true] %s210
      %216 = dma.hbm_to_vmem [thread:$0]  %s19, 256, %s211, [#allocation24], 64, 64, 4
    $region81: #{tpu_custom_call.1} parent=1 // pred_fallthru
      _
    // Predicated region
    $region82: #{tpu_custom_call.1} parent=1 // pred_check
      _
    $region83: #{tpu_custom_call.1} parent=1 // pred_check_branch
      %218 = sbr.rel (0) target = $region85
    $region84: #{tpu_custom_call.1} parent=1 // pred_region
      %s220 = ssub.s32 256, 256
      %221 = vsyncadd [#allocation27], %s220
      %s222 = sshll.u32 [#allocation26], 4
      %s223 = int_to_ptr.vmem [resolvable:$true] %s222
      %228 = dma.hbm_to_vmem [thread:$0]  %s20, 256, %s223, [#allocation27], 64, 64, 4
    $region85: #{tpu_custom_call.1} parent=1 // pred_fallthru
      _
    // Predicated region
    $region86: #{tpu_custom_call.1} parent=1 // pred_check
      _
    $region87: #{tpu_custom_call.1} parent=1 // pred_check_branch
      %230 = sbr.rel (0) target = $region89
    $region88: #{tpu_custom_call.1} parent=1 // pred_region
      _
    $region89: #{tpu_custom_call.1} parent=1 // pred_fallthru
      _
    // Predicated region
    $region90: #{tpu_custom_call.1} parent=1 // pred_check
      _
    $region91: #{tpu_custom_call.1} parent=1 // pred_check_branch
      %232 = sbr.rel (0) target = $region93
    $region92: #{tpu_custom_call.1} parent=1 // pred_region
      _
    $region93: #{tpu_custom_call.1} parent=1 // pred_fallthru
      _
    // Predicated region
    $region94: #{tpu_custom_call.1} parent=1 // pred_check
      _
    $region95: #{tpu_custom_call.1} parent=1 // pred_check_branch
      %234 = sbr.rel (0) target = $region97
    $region96: #{tpu_custom_call.1} parent=1 // pred_region
      _
    $region97: #{tpu_custom_call.1} parent=1 // pred_fallthru
      _
    // Predicated region
    $region98: #{tpu_custom_call.1} parent=1 // pred_check
      _
    $region99: #{tpu_custom_call.1} parent=1 // pred_check_branch
      %236 = sbr.rel (0) target = $region101
    $region100: #{tpu_custom_call.1} parent=1 // pred_region
      %237 = dma.done [#allocation3], 128
    $region101: #{tpu_custom_call.1} parent=1 // pred_fallthru
      _
    // Predicated region
    $region102: #{tpu_custom_call.1} parent=1 // pred_check
      _
    $region103: #{tpu_custom_call.1} parent=1 // pred_check_branch
      %239 = sbr.rel (0) target = $region105
    $region104: #{tpu_custom_call.1} parent=1 // pred_region
      %240 = dma.done [#allocation6], 128
    $region105: #{tpu_custom_call.1} parent=1 // pred_fallthru
      _
    // Predicated region
    $region106: #{tpu_custom_call.1} parent=1 // pred_check
      _
    $region107: #{tpu_custom_call.1} parent=1 // pred_check_branch
      %242 = sbr.rel (0) target = $region109
    $region108: #{tpu_custom_call.1} parent=1 // pred_region
      %243 = dma.done [#allocation6], 16
    $region109: #{tpu_custom_call.1} parent=1 // pred_fallthru
      _
    // Predicated region
    $region110: #{tpu_custom_call.1} parent=1 // pred_check
      _
    $region111: #{tpu_custom_call.1} parent=1 // pred_check_branch
      %245 = sbr.rel (0) target = $region113
    $region112: #{tpu_custom_call.1} parent=1 // pred_region
      %246 = dma.done [#allocation9], 16
    $region113: #{tpu_custom_call.1} parent=1 // pred_fallthru
      _
    // Predicated region
    $region114: #{tpu_custom_call.1} parent=1 // pred_check
      _
    $region115: #{tpu_custom_call.1} parent=1 // pred_check_branch
      %248 = sbr.rel (0) target = $region117
    $region116: #{tpu_custom_call.1} parent=1 // pred_region
      %249 = dma.done [#allocation9], 256
    $region117: #{tpu_custom_call.1} parent=1 // pred_fallthru
      _
    // Predicated region
    $region118: #{tpu_custom_call.1} parent=1 // pred_check
      _
    $region119: #{tpu_custom_call.1} parent=1 // pred_check_branch
      %251 = sbr.rel (0) target = $region121
    $region120: #{tpu_custom_call.1} parent=1 // pred_region
      %252 = dma.done [#allocation12], 256
    $region121: #{tpu_custom_call.1} parent=1 // pred_fallthru
      _
    // Predicated region
    $region122: #{tpu_custom_call.1} parent=1 // pred_check
      _
    $region123: #{tpu_custom_call.1} parent=1 // pred_check_branch
      %254 = sbr.rel (0) target = $region125
    $region124: #{tpu_custom_call.1} parent=1 // pred_region
      %255 = dma.done [#allocation12], 64
    $region125: #{tpu_custom_call.1} parent=1 // pred_fallthru
      _
    // Predicated region
    $region126: #{tpu_custom_call.1} parent=1 // pred_check
      _
    $region127: #{tpu_custom_call.1} parent=1 // pred_check_branch
      %257 = sbr.rel (0) target = $region129
    $region128: #{tpu_custom_call.1} parent=1 // pred_region
      %258 = dma.done [#allocation15], 16
    $region129: #{tpu_custom_call.1} parent=1 // pred_fallthru
      _
    // Predicated region
    $region130: #{tpu_custom_call.1} parent=1 // pred_check
      _
    $region131: #{tpu_custom_call.1} parent=1 // pred_check_branch
      %260 = sbr.rel (0) target = $region133
    $region132: #{tpu_custom_call.1} parent=1 // pred_region
      %261 = dma.done [#allocation15], 256
    $region133: #{tpu_custom_call.1} parent=1 // pred_fallthru
      _
    // Predicated region
    $region134: #{tpu_custom_call.1} parent=1 // pred_check
      _
    $region135: #{tpu_custom_call.1} parent=1 // pred_check_branch
      %263 = sbr.rel (0) target = $region137
    $region136: #{tpu_custom_call.1} parent=1 // pred_region
      %264 = dma.done [#allocation18], 256
    $region137: #{tpu_custom_call.1} parent=1 // pred_fallthru
      _
    // Predicated region
    $region138: #{tpu_custom_call.1} parent=1 // pred_check
      _
    $region139: #{tpu_custom_call.1} parent=1 // pred_check_branch
      %266 = sbr.rel (0) target = $region141
    $region140: #{tpu_custom_call.1} parent=1 // pred_region
      %267 = dma.done [#allocation18], 16
    $region141: #{tpu_custom_call.1} parent=1 // pred_fallthru
      _
    // Predicated region
    $region142: #{tpu_custom_call.1} parent=1 // pred_check
      _
    $region143: #{tpu_custom_call.1} parent=1 // pred_check_branch
      %269 = sbr.rel (0) target = $region145
    $region144: #{tpu_custom_call.1} parent=1 // pred_region
      %270 = dma.done [#allocation21], 256
    $region145: #{tpu_custom_call.1} parent=1 // pred_fallthru
      _
    // Predicated region
    $region146: #{tpu_custom_call.1} parent=1 // pred_check
      _
    $region147: #{tpu_custom_call.1} parent=1 // pred_check_branch
      %272 = sbr.rel (0) target = $region149
    $region148: #{tpu_custom_call.1} parent=1 // pred_region
      %273 = dma.done [#allocation21], 256
    $region149: #{tpu_custom_call.1} parent=1 // pred_fallthru
      _
    // Predicated region
    $region150: #{tpu_custom_call.1} parent=1 // pred_check
      _
    $region151: #{tpu_custom_call.1} parent=1 // pred_check_branch
      %275 = sbr.rel (0) target = $region153
    $region152: #{tpu_custom_call.1} parent=1 // pred_region
      %276 = dma.done [#allocation24], 256
    $region153: #{tpu_custom_call.1} parent=1 // pred_fallthru
      _
    // Predicated region
    $region154: #{tpu_custom_call.1} parent=1 // pred_check
      _
    $region155: #{tpu_custom_call.1} parent=1 // pred_check_branch
      %278 = sbr.rel (0) target = $region157
    $region156: #{tpu_custom_call.1} parent=1 // pred_region
      %279 = dma.done [#allocation24], 256
    $region157: #{tpu_custom_call.1} parent=1 // pred_fallthru
      _
    // Predicated region
    $region158: #{tpu_custom_call.1} parent=1 // pred_check
      _
    $region159: #{tpu_custom_call.1} parent=1 // pred_check_branch
      %281 = sbr.rel (0) target = $region161
    $region160: #{tpu_custom_call.1} parent=1 // pred_region
      %282 = dma.done [#allocation27], 256
    $region161: #{tpu_custom_call.1} parent=1 // pred_fallthru
      _
    %v284 = vld [vmem:[#allocation2] sm:$0xff]
    %v285 = vpack.c.bf16 %v284, %v284
    %v286 = vld [vmem:[#allocation5] sm:$0xf]
    %v287 = vld [vmem:[#allocation5 + $0x4] sm:$0xf]
    %v288 = vld [vmem:[#allocation7] sm:$0x1]
    %v290 = vlaneseq
    %v291 = vshrl.u32 %v290, 7
    %v292 = vsub.s32 0, %v291
    %v293 = vrot.slane %v288, %v292
    %v297 = vunpack.c.l.b16 %v286
    %v298 = vunpack.c.l.b16 %v287
    %v299 = vpack.c.b16 %v298, %v297
    %vm301 = vcmask 130048
    %v303 = vsel %vm301, %v285, 0
    %305 = vmatprep.subr.bf16.mxu0 0
    %306 = vmatpush1.bf16.msra.mxu0 0
    %307 = vmatprep.subr.bf16.mxu0 0
    %308 = vmatpush1.bf16.msra.mxu0 0
    %309 = vmatprep.subr.bf16.mxu0 0
    %310 = vmatpush1.bf16.msra.mxu0 0
    %311 = vmatprep.subr.bf16.mxu0 0
    %312 = vmatpush1.bf16.msra.mxu0 0
    %313 = vmatprep.subr.bf16.mxu0 0
    %314 = vmatpush1.bf16.msra.mxu0 0
    %315 = vmatprep.subr.bf16.mxu0 0
    %316 = vmatpush1.bf16.msra.mxu0 0
    %317 = vmatprep.subr.bf16.mxu0 0
    %318 = vmatpush1.bf16.msra.mxu0 0
    %319 = vmatprep.subr.bf16.mxu0 0
    %320 = vmatpush1.bf16.msra.mxu0 %v299
    %321 = vmatprep.subr.bf16.mxu0 0
    %322 = vmatpush2.bf16.msra.mxu0 0
    %323 = vmatprep.subr.bf16.mxu0 0
    %324 = vmatpush2.bf16.msra.mxu0 0
    %325 = vmatprep.subr.bf16.mxu0 0
    %326 = vmatpush2.bf16.msra.mxu0 0
    %327 = vmatprep.subr.bf16.mxu0 0
    %328 = vmatpush2.bf16.msra.mxu0 0
    %329 = vmatprep.subr.bf16.mxu0 0
    %330 = vmatpush2.bf16.msra.mxu0 0
    %331 = vmatprep.subr.bf16.mxu0 0
    %332 = vmatpush2.bf16.msra.mxu0 0
    %333 = vmatprep.subr.bf16.mxu0 0
    %334 = vmatpush2.bf16.msra.mxu0 0
    %335 = vmatprep.subr.bf16.mxu0 0
    %336 = vmatpush2.bf16.msra.mxu0 0
    %337 = vmatprep.mubr.bf16.mxu0 0
    %338 = vmatmul.mubr.bf16.gmra.mxu0 %v303
    %v339 = vpop.f32.mrf.mxu0
    %v340 = vadd.f32 %v293, %v339
    %v341 = vpop.f32.mrf.mxu0
    %v342 = vpop.f32.mrf.mxu0
    %v343 = vpop.f32.mrf.mxu0
    %344 = vdwg.mxu0
    %v345 = vpack.c.bf16 %v340, %v340
    %v346 = vld [vmem:[%s3] sm:$0xf]
    %v347 = vld [vmem:[%s3 + $0x4] sm:$0xf]
    %v348 = vld [vmem:[%s3 + $0x8] sm:$0xf]
    %v349 = vld [vmem:[%s3 + $0xc] sm:$0xf]
    %v350 = vld [vmem:[#allocation8] sm:$0x1]
    %v352 = vlaneseq
    %v353 = vshrl.u32 %v352, 7
    %v354 = vsub.s32 0, %v353
    %v355 = vrot.slane %v350, %v354
    %v361 = vunpack.c.l.b16 %v346
    %v362 = vunpack.c.l.b16 %v347
    %v363 = vunpack.c.l.b16 %v348
    %v364 = vunpack.c.l.b16 %v349
    %v365 = vpack.c.b16 %v362, %v361
    %v366 = vpack.c.b16 %v364, %v363
    %vm369 = vcmask 261120
    %v371 = vsel %vm369, %v345, 0
    %373 = vmatprep.subr.bf16.mxu0 0
    %374 = vmatpush1.bf16.msra.mxu0 0
    %375 = vmatprep.subr.bf16.mxu0 0
    %376 = vmatpush1.bf16.msra.mxu0 0
    %377 = vmatprep.subr.bf16.mxu0 0
    %378 = vmatpush1.bf16.msra.mxu0 0
    %379 = vmatprep.subr.bf16.mxu0 0
    %380 = vmatpush1.bf16.msra.mxu0 0
    %381 = vmatprep.subr.bf16.mxu0 0
    %382 = vmatpush1.bf16.msra.mxu0 0
    %383 = vmatprep.subr.bf16.mxu0 0
    %384 = vmatpush1.bf16.msra.mxu0 0
    %385 = vmatprep.subr.bf16.mxu0 0
    %386 = vmatpush1.bf16.msra.mxu0 %v366
    %387 = vmatprep.subr.bf16.mxu0 0
    %388 = vmatpush1.bf16.msra.mxu0 %v365
    %389 = vmatprep.subr.bf16.mxu0 0
    %390 = vmatpush2.bf16.msra.mxu0 0
    %391 = vmatprep.subr.bf16.mxu0 0
    %392 = vmatpush2.bf16.msra.mxu0 0
    %393 = vmatprep.subr.bf16.mxu0 0
    %394 = vmatpush2.bf16.msra.mxu0 0
    %395 = vmatprep.subr.bf16.mxu0 0
    %396 = vmatpush2.bf16.msra.mxu0 0
    %397 = vmatprep.subr.bf16.mxu0 0
    %398 = vmatpush2.bf16.msra.mxu0 0
    %399 = vmatprep.subr.bf16.mxu0 0
    %400 = vmatpush2.bf16.msra.mxu0 0
    %401 = vmatprep.subr.bf16.mxu0 0
    %402 = vmatpush2.bf16.msra.mxu0 0
    %403 = vmatprep.subr.bf16.mxu0 0
    %404 = vmatpush2.bf16.msra.mxu0 0
    %405 = vmatprep.mubr.bf16.mxu0 0
    %406 = vmatmul.mubr.bf16.gmra.mxu0 %v371
    %v407 = vpop.f32.mrf.mxu0
    %v408 = vadd.f32 %v355, %v407
    %v409 = vpop.f32.mrf.mxu0
    %v410 = vpop.f32.mrf.mxu0
    %v411 = vpop.f32.mrf.mxu0
    %412 = vdwg.mxu0
    %v413 = vpack.c.bf16 %v408, %v408
    %v414 = vld [vmem:[#allocation10] sm:$0xf]
    %v415 = vld [vmem:[#allocation10 + $0x4] sm:$0xf]
    %v416 = vld [vmem:[#allocation10 + $0x8] sm:$0xf]
    %v417 = vld [vmem:[#allocation10 + $0xc] sm:$0xf]
    %v422 = vunpack.c.l.b16 %v414
    %v423 = vunpack.c.l.b16 %v415
    %v424 = vunpack.c.l.b16 %v416
    %v425 = vunpack.c.l.b16 %v417
    %v426 = vpack.c.b16 %v423, %v422
    %v427 = vpack.c.b16 %v425, %v424
    %v431 = vsel %vm369, %v413, 0
    %433 = vmatprep.subr.bf16.mxu0 0
    %434 = vmatpush1.bf16.msra.mxu0 0
    %435 = vmatprep.subr.bf16.mxu0 0
    %436 = vmatpush1.bf16.msra.mxu0 0
    %437 = vmatprep.subr.bf16.mxu0 0
    %438 = vmatpush1.bf16.msra.mxu0 0
    %439 = vmatprep.subr.bf16.mxu0 0
    %440 = vmatpush1.bf16.msra.mxu0 0
    %441 = vmatprep.subr.bf16.mxu0 0
    %442 = vmatpush1.bf16.msra.mxu0 0
    %443 = vmatprep.subr.bf16.mxu0 0
    %444 = vmatpush1.bf16.msra.mxu0 0
    %445 = vmatprep.subr.bf16.mxu0 0
    %446 = vmatpush1.bf16.msra.mxu0 %v427
    %447 = vmatprep.subr.bf16.mxu0 0
    %448 = vmatpush1.bf16.msra.mxu0 %v426
    %449 = vmatprep.subr.bf16.mxu0 0
    %450 = vmatpush2.bf16.msra.mxu0 0
    %451 = vmatprep.subr.bf16.mxu0 0
    %452 = vmatpush2.bf16.msra.mxu0 0
    %453 = vmatprep.subr.bf16.mxu0 0
    %454 = vmatpush2.bf16.msra.mxu0 0
    %455 = vmatprep.subr.bf16.mxu0 0
    %456 = vmatpush2.bf16.msra.mxu0 0
    %457 = vmatprep.subr.bf16.mxu0 0
    %458 = vmatpush2.bf16.msra.mxu0 0
    %459 = vmatprep.subr.bf16.mxu0 0
    %460 = vmatpush2.bf16.msra.mxu0 0
    %461 = vmatprep.subr.bf16.mxu0 0
    %462 = vmatpush2.bf16.msra.mxu0 0
    %463 = vmatprep.subr.bf16.mxu0 0
    %464 = vmatpush2.bf16.msra.mxu0 0
    %465 = vmatprep.mubr.bf16.mxu0 0
    %466 = vmatmul.mubr.bf16.gmra.mxu0 %v431
    %v467 = vpop.f32.mrf.mxu0
    %v468 = vadd.f32 0.0, %v467
    %v469 = vpop.f32.mrf.mxu0
    %v470 = vpop.f32.mrf.mxu0
    %v471 = vpop.f32.mrf.mxu0
    %472 = vdwg.mxu0
    %v473 = vmul.f32 %v468, 0.17677669
    %v474 = vsel %vm369, %v473, -inf
    %475 = vmax.xlane.f32.xlu0 %v474
    %v476 = vpop.xlane.xlu0 %475
    %v477 = vsub.f32 %v473, %v476
    %v478 = vmul.f32 %v477, 1.442695
    %v479 = vpow.pop %v478
    %v480 = vsel %vm369, %v479, 0.0
    %481 = vadd.xlane.f32.xlu0 %v480
    %v482 = vpop.xlane.xlu0 %481
    %v483 = vrcp.pop %v482
    %v484 = vpack.c.bf16 %v479, %v479
    %v485 = vld [vmem:[#allocation11] sm:$0xf]
    %v486 = vld [vmem:[#allocation11 + $0x4] sm:$0xf]
    %v487 = vld [vmem:[#allocation11 + $0x8] sm:$0xf]
    %v488 = vld [vmem:[#allocation11 + $0xc] sm:$0xf]
    %v493 = vunpack.c.l.b16 %v485
    %v494 = vunpack.c.l.b16 %v486
    %v495 = vunpack.c.l.b16 %v487
    %v496 = vunpack.c.l.b16 %v488
    %v497 = vpack.c.b16 %v494, %v493
    %v498 = vpack.c.b16 %v496, %v495
    %v502 = vsel %vm369, %v484, 0
    %504 = vmatprep.subr.bf16.mxu0 0
    %505 = vmatpush1.bf16.msra.mxu0 0
    %506 = vmatprep.subr.bf16.mxu0 0
    %507 = vmatpush1.bf16.msra.mxu0 0
    %508 = vmatprep.subr.bf16.mxu0 0
    %509 = vmatpush1.bf16.msra.mxu0 0
    %510 = vmatprep.subr.bf16.mxu0 0
    %511 = vmatpush1.bf16.msra.mxu0 0
    %512 = vmatprep.subr.bf16.mxu0 0
    %513 = vmatpush1.bf16.msra.mxu0 0
    %514 = vmatprep.subr.bf16.mxu0 0
    %515 = vmatpush1.bf16.msra.mxu0 0
    %516 = vmatprep.subr.bf16.mxu0 0
    %517 = vmatpush1.bf16.msra.mxu0 %v498
    %518 = vmatprep.subr.bf16.mxu0 0
    %519 = vmatpush1.bf16.msra.mxu0 %v497
    %520 = vmatprep.subr.bf16.mxu0 0
    %521 = vmatpush2.bf16.msra.mxu0 0
    %522 = vmatprep.subr.bf16.mxu0 0
    %523 = vmatpush2.bf16.msra.mxu0 0
    %524 = vmatprep.subr.bf16.mxu0 0
    %525 = vmatpush2.bf16.msra.mxu0 0
    %526 = vmatprep.subr.bf16.mxu0 0
    %527 = vmatpush2.bf16.msra.mxu0 0
    %528 = vmatprep.subr.bf16.mxu0 0
    %529 = vmatpush2.bf16.msra.mxu0 0
    %530 = vmatprep.subr.bf16.mxu0 0
    %531 = vmatpush2.bf16.msra.mxu0 0
    %532 = vmatprep.subr.bf16.mxu0 0
    %533 = vmatpush2.bf16.msra.mxu0 0
    %534 = vmatprep.subr.bf16.mxu0 0
    %535 = vmatpush2.bf16.msra.mxu0 0
    %536 = vmatprep.mubr.bf16.mxu0 0
    %537 = vmatmul.mubr.bf16.gmra.mxu0 %v502
    %v538 = vpop.f32.mrf.mxu0
    %v539 = vadd.f32 0.0, %v538
    %v540 = vpop.f32.mrf.mxu0
    %v541 = vpop.f32.mrf.mxu0
    %v542 = vpop.f32.mrf.mxu0
    %543 = vdwg.mxu0
    %v544 = vmul.f32 %v539, %v483
    %545 = vmatprep.subr.bf16.mxu0 0
    %546 = vmatpush1.bf16.xpose.msra.mxu0 0
    %547 = vmatprep.subr.bf16.mxu0 0
    %548 = vmatpush1.bf16.xpose.msra.mxu0 0
    %549 = vmatprep.subr.bf16.mxu0 0
    %550 = vmatpush1.bf16.xpose.msra.mxu0 0
    %551 = vmatprep.subr.bf16.mxu0 0
    %552 = vmatpush1.bf16.xpose.msra.mxu0 0
    %553 = vmatprep.subr.bf16.mxu0 0
    %554 = vmatpush1.bf16.xpose.msra.mxu0 0
    %555 = vmatprep.subr.bf16.mxu0 0
    %556 = vmatpush1.bf16.xpose.msra.mxu0 0
    %557 = vmatprep.subr.bf16.mxu0 0
    %558 = vmatpush1.bf16.xpose.msra.mxu0 0
    %559 = vmatprep.subr.bf16.mxu0 0
    %560 = vmatpush1.bf16.xpose.msra.mxu0 %v371
    %561 = vmatprep.subr.bf16.mxu0 0
    %562 = vmatpush2.bf16.xpose.msra.mxu0 0
    %563 = vmatprep.subr.bf16.mxu0 0
    %564 = vmatpush2.bf16.xpose.msra.mxu0 0
    %565 = vmatprep.subr.bf16.mxu0 0
    %566 = vmatpush2.bf16.xpose.msra.mxu0 0
    %567 = vmatprep.subr.bf16.mxu0 0
    %568 = vmatpush2.bf16.xpose.msra.mxu0 0
    %569 = vmatprep.subr.bf16.mxu0 0
    %570 = vmatpush2.bf16.xpose.msra.mxu0 0
    %571 = vmatprep.subr.bf16.mxu0 0
    %572 = vmatpush2.bf16.xpose.msra.mxu0 0
    %573 = vmatprep.subr.bf16.mxu0 0
    %574 = vmatpush2.bf16.xpose.msra.mxu0 0
    %575 = vmatprep.subr.bf16.mxu0 0
    %576 = vmatpush2.bf16.xpose.msra.mxu0 0
    %577 = vmatprep.mubr.bf16.mxu0 0
    %578 = vmatmul.mubr.bf16.gmra.mxu0 %v371
    %v579 = vpop.f32.mrf.mxu0
    %v580 = vadd.f32 0.0, %v579
    %v581 = vpop.f32.mrf.mxu0
    %v582 = vpop.f32.mrf.mxu0
    %v583 = vpop.f32.mrf.mxu0
    %584 = vdwg.mxu0
    %v585 = vmul.f32 %v580, 0.17677669
    %v586 = vld [vmem:[%s7] sm:$0xf]
    %v587 = vld [vmem:[%s7 + $0x4] sm:$0xf]
    %v588 = vld [vmem:[%s7 + $0x8] sm:$0xf]
    %v589 = vld [vmem:[%s7 + $0xc] sm:$0xf]
    %v594 = vunpack.c.l.b16 %v586
    %v595 = vunpack.c.l.b16 %v587
    %v596 = vunpack.c.l.b16 %v588
    %v597 = vunpack.c.l.b16 %v589
    %v598 = vpack.c.b16 %v595, %v594
    %v599 = vpack.c.b16 %v597, %v596
    %602 = vmatprep.subr.bf16.mxu0 0
    %603 = vmatpush1.bf16.msra.mxu0 0
    %604 = vmatprep.subr.bf16.mxu0 0
    %605 = vmatpush1.bf16.msra.mxu0 0
    %606 = vmatprep.subr.bf16.mxu0 0
    %607 = vmatpush1.bf16.msra.mxu0 0
    %608 = vmatprep.subr.bf16.mxu0 0
    %609 = vmatpush1.bf16.msra.mxu0 0
    %610 = vmatprep.subr.bf16.mxu0 0
    %611 = vmatpush1.bf16.msra.mxu0 0
    %612 = vmatprep.subr.bf16.mxu0 0
    %613 = vmatpush1.bf16.msra.mxu0 0
    %614 = vmatprep.subr.bf16.mxu0 0
    %615 = vmatpush1.bf16.msra.mxu0 %v599
    %616 = vmatprep.subr.bf16.mxu0 0
    %617 = vmatpush1.bf16.msra.mxu0 %v598
    %618 = vmatprep.subr.bf16.mxu0 0
    %619 = vmatpush2.bf16.msra.mxu0 0
    %620 = vmatprep.subr.bf16.mxu0 0
    %621 = vmatpush2.bf16.msra.mxu0 0
    %622 = vmatprep.subr.bf16.mxu0 0
    %623 = vmatpush2.bf16.msra.mxu0 0
    %624 = vmatprep.subr.bf16.mxu0 0
    %625 = vmatpush2.bf16.msra.mxu0 0
    %626 = vmatprep.subr.bf16.mxu0 0
    %627 = vmatpush2.bf16.msra.mxu0 0
    %628 = vmatprep.subr.bf16.mxu0 0
    %629 = vmatpush2.bf16.msra.mxu0 0
    %630 = vmatprep.subr.bf16.mxu0 0
    %631 = vmatpush2.bf16.msra.mxu0 0
    %632 = vmatprep.subr.bf16.mxu0 0
    %633 = vmatpush2.bf16.msra.mxu0 0
    %634 = vmatprep.mubr.bf16.mxu0 0
    %635 = vmatmul.mubr.bf16.gmra.mxu0 %v371
    %v636 = vpop.f32.mrf.mxu0
    %v637 = vadd.f32 0.0, %v636
    %v638 = vpop.f32.mrf.mxu0
    %v639 = vpop.f32.mrf.mxu0
    %v640 = vpop.f32.mrf.mxu0
    %641 = vdwg.mxu0
    %v642 = vmul.f32 %v637, 0.17677669
    %vm643 = vcmask 64512
    %v644 = vsel %vm643, %v585, -inf
    %645 = vmax.xlane.f32.xlu0 %v644
    %v646 = vpop.xlane.xlu0 %645
    %v647 = vsel %vm643, %v642, -inf
    %648 = vmax.xlane.f32.xlu0 %v647
    %v649 = vpop.xlane.xlu0 %648
    %v650 = vmax.f32 %v646, %v649
    %v651 = vsub.f32 %v585, %v650
    %v652 = vmul.f32 %v651, 1.442695
    %v653 = vpow.pop %v652
    %v654 = vsub.f32 %v642, %v650
    %v655 = vmul.f32 %v654, 1.442695
    %v656 = vpow.pop %v655
    %v657 = vsel %vm643, %v653, 0.0
    %658 = vadd.xlane.f32.xlu0 %v657
    %v659 = vpop.xlane.xlu0 %658
    %v660 = vsel %vm643, %v656, 0.0
    %661 = vadd.xlane.f32.xlu0 %v660
    %v662 = vpop.xlane.xlu0 %661
    %v663 = vadd.f32 %v659, %v662
    %v664 = vrcp.pop %v663
    %v665 = vpack.c.bf16 %v653, %v653
    %v666 = vpack.c.bf16 %v656, %v656
    %v667 = vld [vmem:[#allocation13] sm:$0xf]
    %v669 = vsel %vm643, %v666, 0
    %vm671 = vcmask 1043456
    %v673 = vsel %vm671, %v667, 0
    %675 = vmatprep.subr.bf16.mxu0 0
    %676 = vmatpush1.bf16.msra.mxu0 0
    %677 = vmatprep.subr.bf16.mxu0 0
    %678 = vmatpush1.bf16.msra.mxu0 0
    %679 = vmatprep.subr.bf16.mxu0 0
    %680 = vmatpush1.bf16.msra.mxu0 0
    %681 = vmatprep.subr.bf16.mxu0 0
    %682 = vmatpush1.bf16.msra.mxu0 0
    %683 = vmatprep.subr.bf16.mxu0 0
    %684 = vmatpush1.bf16.msra.mxu0 0
    %685 = vmatprep.subr.bf16.mxu0 0
    %686 = vmatpush1.bf16.msra.mxu0 0
    %687 = vmatprep.subr.bf16.mxu0 0
    %688 = vmatpush1.bf16.msra.mxu0 0
    %689 = vmatprep.subr.bf16.mxu0 0
    %690 = vmatpush1.bf16.msra.mxu0 %v673
    %691 = vmatprep.subr.bf16.mxu0 0
    %692 = vmatpush2.bf16.msra.mxu0 0
    %693 = vmatprep.subr.bf16.mxu0 0
    %694 = vmatpush2.bf16.msra.mxu0 0
    %695 = vmatprep.subr.bf16.mxu0 0
    %696 = vmatpush2.bf16.msra.mxu0 0
    %697 = vmatprep.subr.bf16.mxu0 0
    %698 = vmatpush2.bf16.msra.mxu0 0
    %699 = vmatprep.subr.bf16.mxu0 0
    %700 = vmatpush2.bf16.msra.mxu0 0
    %701 = vmatprep.subr.bf16.mxu0 0
    %702 = vmatpush2.bf16.msra.mxu0 0
    %703 = vmatprep.subr.bf16.mxu0 0
    %704 = vmatpush2.bf16.msra.mxu0 0
    %705 = vmatprep.subr.bf16.mxu0 0
    %706 = vmatpush2.bf16.msra.mxu0 0
    %707 = vmatprep.mubr.bf16.mxu0 0
    %708 = vmatmul.mubr.bf16.gmra.mxu0 %v669
    %v709 = vpop.f32.mrf.mxu0
    %v710 = vadd.f32 0.0, %v709
    %v711 = vpop.f32.mrf.mxu0
    %v712 = vpop.f32.mrf.mxu0
    %v713 = vpop.f32.mrf.mxu0
    %714 = vdwg.mxu0
    %v716 = vsel %vm643, %v665, 0
    %v718 = vsel %vm671, %v345, 0
    %720 = vmatprep.subr.bf16.mxu0 0
    %721 = vmatpush1.bf16.msra.mxu0 0
    %722 = vmatprep.subr.bf16.mxu0 0
    %723 = vmatpush1.bf16.msra.mxu0 0
    %724 = vmatprep.subr.bf16.mxu0 0
    %725 = vmatpush1.bf16.msra.mxu0 0
    %726 = vmatprep.subr.bf16.mxu0 0
    %727 = vmatpush1.bf16.msra.mxu0 0
    %728 = vmatprep.subr.bf16.mxu0 0
    %729 = vmatpush1.bf16.msra.mxu0 0
    %730 = vmatprep.subr.bf16.mxu0 0
    %731 = vmatpush1.bf16.msra.mxu0 0
    %732 = vmatprep.subr.bf16.mxu0 0
    %733 = vmatpush1.bf16.msra.mxu0 0
    %734 = vmatprep.subr.bf16.mxu0 0
    %735 = vmatpush1.bf16.msra.mxu0 %v718
    %736 = vmatprep.subr.bf16.mxu0 0
    %737 = vmatpush2.bf16.msra.mxu0 0
    %738 = vmatprep.subr.bf16.mxu0 0
    %739 = vmatpush2.bf16.msra.mxu0 0
    %740 = vmatprep.subr.bf16.mxu0 0
    %741 = vmatpush2.bf16.msra.mxu0 0
    %742 = vmatprep.subr.bf16.mxu0 0
    %743 = vmatpush2.bf16.msra.mxu0 0
    %744 = vmatprep.subr.bf16.mxu0 0
    %745 = vmatpush2.bf16.msra.mxu0 0
    %746 = vmatprep.subr.bf16.mxu0 0
    %747 = vmatpush2.bf16.msra.mxu0 0
    %748 = vmatprep.subr.bf16.mxu0 0
    %749 = vmatpush2.bf16.msra.mxu0 0
    %750 = vmatprep.subr.bf16.mxu0 0
    %751 = vmatpush2.bf16.msra.mxu0 0
    %752 = vmatprep.mubr.bf16.mxu0 0
    %753 = vmatmul.mubr.bf16.gmra.mxu0 %v716
    %v754 = vpop.f32.mrf.mxu0
    %v755 = vadd.f32 %v710, %v754
    %v756 = vpop.f32.mrf.mxu0
    %v757 = vpop.f32.mrf.mxu0
    %v758 = vpop.f32.mrf.mxu0
    %759 = vdwg.mxu0
    %v760 = vmul.f32 %v755, %v664
    %v761 = vld [vmem:[%s9] sm:$0xf]
    %v762 = vld [vmem:[%s9 + $0x4] sm:$0xf]
    %v763 = vld [vmem:[%s9 + $0x8] sm:$0xf]
    %v764 = vld [vmem:[%s9 + $0xc] sm:$0xf]
    %v765 = vld [vmem:[#allocation14] sm:$0x1]
    %v767 = vlaneseq
    %v768 = vshrl.u32 %v767, 7
    %v769 = vsub.s32 0, %v768
    %v770 = vrot.slane %v765, %v769
    %v776 = vunpack.c.l.b16 %v761
    %v777 = vunpack.c.l.b16 %v762
    %v778 = vunpack.c.l.b16 %v763
    %v779 = vunpack.c.l.b16 %v764
    %v780 = vpack.c.b16 %v777, %v776
    %v781 = vpack.c.b16 %v779, %v778
    %784 = vmatprep.subr.bf16.mxu0 0
    %785 = vmatpush1.bf16.msra.mxu0 0
    %786 = vmatprep.subr.bf16.mxu0 0
    %787 = vmatpush1.bf16.msra.mxu0 0
    %788 = vmatprep.subr.bf16.mxu0 0
    %789 = vmatpush1.bf16.msra.mxu0 0
    %790 = vmatprep.subr.bf16.mxu0 0
    %791 = vmatpush1.bf16.msra.mxu0 0
    %792 = vmatprep.subr.bf16.mxu0 0
    %793 = vmatpush1.bf16.msra.mxu0 0
    %794 = vmatprep.subr.bf16.mxu0 0
    %795 = vmatpush1.bf16.msra.mxu0 0
    %796 = vmatprep.subr.bf16.mxu0 0
    %797 = vmatpush1.bf16.msra.mxu0 %v781
    %798 = vmatprep.subr.bf16.mxu0 0
    %799 = vmatpush1.bf16.msra.mxu0 %v780
    %800 = vmatprep.subr.bf16.mxu0 0
    %801 = vmatpush2.bf16.msra.mxu0 0
    %802 = vmatprep.subr.bf16.mxu0 0
    %803 = vmatpush2.bf16.msra.mxu0 0
    %804 = vmatprep.subr.bf16.mxu0 0
    %805 = vmatpush2.bf16.msra.mxu0 0
    %806 = vmatprep.subr.bf16.mxu0 0
    %807 = vmatpush2.bf16.msra.mxu0 0
    %808 = vmatprep.subr.bf16.mxu0 0
    %809 = vmatpush2.bf16.msra.mxu0 0
    %810 = vmatprep.subr.bf16.mxu0 0
    %811 = vmatpush2.bf16.msra.mxu0 0
    %812 = vmatprep.subr.bf16.mxu0 0
    %813 = vmatpush2.bf16.msra.mxu0 0
    %814 = vmatprep.subr.bf16.mxu0 0
    %815 = vmatpush2.bf16.msra.mxu0 0
    %816 = vmatprep.mubr.bf16.mxu0 0
    %817 = vmatmul.mubr.bf16.gmra.mxu0 %v371
    %v818 = vpop.f32.mrf.mxu0
    %v819 = vadd.f32 %v770, %v818
    %v820 = vpop.f32.mrf.mxu0
    %v821 = vpop.f32.mrf.mxu0
    %v822 = vpop.f32.mrf.mxu0
    %823 = vdwg.mxu0
    %v824 = vpack.c.bf16 %v819, %v819
    %v825 = vld [vmem:[#allocation16] sm:$0xf]
    %v826 = vld [vmem:[#allocation16 + $0x4] sm:$0xf]
    %v827 = vld [vmem:[#allocation16 + $0x8] sm:$0xf]
    %v828 = vld [vmem:[#allocation16 + $0xc] sm:$0xf]
    %v833 = vunpack.c.l.b16 %v825
    %v834 = vunpack.c.l.b16 %v826
    %v835 = vunpack.c.l.b16 %v827
    %v836 = vunpack.c.l.b16 %v828
    %v837 = vpack.c.b16 %v834, %v833
    %v838 = vpack.c.b16 %v836, %v835
    %v842 = vsel %vm369, %v824, 0
    %844 = vmatprep.subr.bf16.mxu0 0
    %845 = vmatpush1.bf16.msra.mxu0 0
    %846 = vmatprep.subr.bf16.mxu0 0
    %847 = vmatpush1.bf16.msra.mxu0 0
    %848 = vmatprep.subr.bf16.mxu0 0
    %849 = vmatpush1.bf16.msra.mxu0 0
    %850 = vmatprep.subr.bf16.mxu0 0
    %851 = vmatpush1.bf16.msra.mxu0 0
    %852 = vmatprep.subr.bf16.mxu0 0
    %853 = vmatpush1.bf16.msra.mxu0 0
    %854 = vmatprep.subr.bf16.mxu0 0
    %855 = vmatpush1.bf16.msra.mxu0 0
    %856 = vmatprep.subr.bf16.mxu0 0
    %857 = vmatpush1.bf16.msra.mxu0 %v838
    %858 = vmatprep.subr.bf16.mxu0 0
    %859 = vmatpush1.bf16.msra.mxu0 %v837
    %860 = vmatprep.subr.bf16.mxu0 0
    %861 = vmatpush2.bf16.msra.mxu0 0
    %862 = vmatprep.subr.bf16.mxu0 0
    %863 = vmatpush2.bf16.msra.mxu0 0
    %864 = vmatprep.subr.bf16.mxu0 0
    %865 = vmatpush2.bf16.msra.mxu0 0
    %866 = vmatprep.subr.bf16.mxu0 0
    %867 = vmatpush2.bf16.msra.mxu0 0
    %868 = vmatprep.subr.bf16.mxu0 0
    %869 = vmatpush2.bf16.msra.mxu0 0
    %870 = vmatprep.subr.bf16.mxu0 0
    %871 = vmatpush2.bf16.msra.mxu0 0
    %872 = vmatprep.subr.bf16.mxu0 0
    %873 = vmatpush2.bf16.msra.mxu0 0
    %874 = vmatprep.subr.bf16.mxu0 0
    %875 = vmatpush2.bf16.msra.mxu0 0
    %876 = vmatprep.mubr.bf16.mxu0 0
    %877 = vmatmul.mubr.bf16.gmra.mxu0 %v842
    %v878 = vpop.f32.mrf.mxu0
    %v879 = vadd.f32 0.0, %v878
    %v880 = vpop.f32.mrf.mxu0
    %v881 = vpop.f32.mrf.mxu0
    %v882 = vpop.f32.mrf.mxu0
    %883 = vdwg.mxu0
    %v884 = vmul.f32 %v879, 0.17677669
    %v885 = vlaneseq
    %v886 = vand.u32 %v885, 127
    %vm887 = vcmp.ge.s32.totalorder %v886, 0
    %vm888 = vcmp.lt.s32.totalorder %v886, 32
    %vm889 = vmand %vm887, %vm888
    %v890 = vsel %vm889, 1, 0
    %vm891 = vcmp.eq.s32.totalorder %v890, 1
    %v892 = vsel %vm891, %v884, -inf
    %vm893 = vcmask 457728
    %v894 = vsel %vm893, %v892, -inf
    %895 = vmax.xlane.f32.xlu0 %v894
    %v896 = vpop.xlane.xlu0 %895
    %v897 = vsub.f32 %v892, %v896
    %v898 = vmul.f32 %v897, 1.442695
    %v899 = vpow.pop %v898
    %v900 = vsel %vm893, %v899, 0.0
    %901 = vadd.xlane.f32.xlu0 %v900
    %v902 = vpop.xlane.xlu0 %901
    %v903 = vrcp.pop %v902
    %v904 = vmul.f32 %v899, %v903
    %v905 = vadd.f32 %v904, 0.0
    %vm906 = vcmp.ge.s32.totalorder %v886, 32
    %vm907 = vcmp.lt.s32.totalorder %v886, 48
    %vm908 = vmand %vm906, %vm907
    %v909 = vsel %vm908, 1, 0
    %vm910 = vcmp.eq.s32.totalorder %v909, 1
    %v911 = vsel %vm910, %v884, -inf
    %v912 = vsel %vm893, %v911, -inf
    %913 = vmax.xlane.f32.xlu0 %v912
    %v914 = vpop.xlane.xlu0 %913
    %v915 = vsub.f32 %v911, %v914
    %v916 = vmul.f32 %v915, 1.442695
    %v917 = vpow.pop %v916
    %v918 = vsel %vm893, %v917, 0.0
    %919 = vadd.xlane.f32.xlu0 %v918
    %v920 = vpop.xlane.xlu0 %919
    %v921 = vrcp.pop %v920
    %v922 = vmul.f32 %v917, %v921
    %v923 = vadd.f32 %v905, %v922
    %vm924 = vcmp.ge.s32.totalorder %v886, 48
    %vm925 = vcmp.lt.s32.totalorder %v886, 56
    %vm926 = vmand %vm924, %vm925
    %v927 = vsel %vm926, 1, 0
    %vm928 = vcmp.eq.s32.totalorder %v927, 1
    %v929 = vsel %vm928, %v884, -inf
    %v930 = vsel %vm893, %v929, -inf
    %931 = vmax.xlane.f32.xlu0 %v930
    %v932 = vpop.xlane.xlu0 %931
    %v933 = vsub.f32 %v929, %v932
    %v934 = vmul.f32 %v933, 1.442695
    %v935 = vpow.pop %v934
    %v936 = vsel %vm893, %v935, 0.0
    %937 = vadd.xlane.f32.xlu0 %v936
    %v938 = vpop.xlane.xlu0 %937
    %v939 = vrcp.pop %v938
    %v940 = vmul.f32 %v935, %v939
    %v941 = vadd.f32 %v923, %v940
    %v942 = vmul.f32 %v941, 0.33333334
    %v943 = vpack.c.bf16 %v942, %v942
    %v944 = vld [vmem:[%s12] sm:$0xf]
    %v945 = vld [vmem:[%s12 + $0x4] sm:$0xf]
    %v946 = vld [vmem:[%s12 + $0x8] sm:$0xf]
    %v947 = vld [vmem:[%s12 + $0xc] sm:$0xf]
    %v948 = vld [vmem:[%s12 + $0x10] sm:$0xf]
    %v949 = vld [vmem:[%s12 + $0x14] sm:$0xf]
    %v950 = vld [vmem:[%s12 + $0x18] sm:$0xf]
    %v958 = vunpack.c.l.b16 %v944
    %v959 = vunpack.c.l.b16 %v945
    %v960 = vunpack.c.l.b16 %v946
    %v961 = vunpack.c.l.b16 %v947
    %v962 = vunpack.c.l.b16 %v948
    %v963 = vunpack.c.l.b16 %v949
    %v964 = vunpack.c.l.b16 %v950
    %v965 = vpack.c.b16 %v959, %v958
    %v966 = vpack.c.b16 %v961, %v960
    %v967 = vpack.c.b16 %v963, %v962
    %v968 = vpack.c.b16 %v964, %v964
    %v973 = vsel %vm893, %v943, 0
    %v976 = vsel %vm671, %v968, 0
    %978 = vmatprep.subr.bf16.mxu0 0
    %979 = vmatpush1.bf16.msra.mxu0 0
    %980 = vmatprep.subr.bf16.mxu0 0
    %981 = vmatpush1.bf16.msra.mxu0 0
    %982 = vmatprep.subr.bf16.mxu0 0
    %983 = vmatpush1.bf16.msra.mxu0 0
    %984 = vmatprep.subr.bf16.mxu0 0
    %985 = vmatpush1.bf16.msra.mxu0 0
    %986 = vmatprep.subr.bf16.mxu0 0
    %987 = vmatpush1.bf16.msra.mxu0 %v976
    %988 = vmatprep.subr.bf16.mxu0 0
    %989 = vmatpush1.bf16.msra.mxu0 %v967
    %990 = vmatprep.subr.bf16.mxu0 0
    %991 = vmatpush1.bf16.msra.mxu0 %v966
    %992 = vmatprep.subr.bf16.mxu0 0
    %993 = vmatpush1.bf16.msra.mxu0 %v965
    %994 = vmatprep.subr.bf16.mxu0 0
    %995 = vmatpush2.bf16.msra.mxu0 0
    %996 = vmatprep.subr.bf16.mxu0 0
    %997 = vmatpush2.bf16.msra.mxu0 0
    %998 = vmatprep.subr.bf16.mxu0 0
    %999 = vmatpush2.bf16.msra.mxu0 0
    %1000 = vmatprep.subr.bf16.mxu0 0
    %1001 = vmatpush2.bf16.msra.mxu0 0
    %1002 = vmatprep.subr.bf16.mxu0 0
    %1003 = vmatpush2.bf16.msra.mxu0 0
    %1004 = vmatprep.subr.bf16.mxu0 0
    %1005 = vmatpush2.bf16.msra.mxu0 0
    %1006 = vmatprep.subr.bf16.mxu0 0
    %1007 = vmatpush2.bf16.msra.mxu0 0
    %1008 = vmatprep.subr.bf16.mxu0 0
    %1009 = vmatpush2.bf16.msra.mxu0 0
    %1010 = vmatprep.mubr.bf16.mxu0 0
    %1011 = vmatmul.mubr.bf16.gmra.mxu0 %v973
    %v1012 = vpop.f32.mrf.mxu0
    %v1013 = vadd.f32 0.0, %v1012
    %v1014 = vpop.f32.mrf.mxu0
    %v1015 = vpop.f32.mrf.mxu0
    %v1016 = vpop.f32.mrf.mxu0
    %1017 = vdwg.mxu0
    %v1018 = vld [vmem:[#allocation17] sm:$0xf]
    %v1019 = vld [vmem:[#allocation17 + $0x4] sm:$0xf]
    %v1020 = vld [vmem:[#allocation17 + $0x8] sm:$0xf]
    %v1021 = vld [vmem:[#allocation17 + $0xc] sm:$0xf]
    %v1022 = vld [vmem:[#allocation19] sm:$0x1]
    %v1024 = vlaneseq
    %v1025 = vshrl.u32 %v1024, 7
    %v1026 = vsub.s32 0, %v1025
    %v1027 = vrot.slane %v1022, %v1026
    %v1033 = vunpack.c.l.b16 %v1018
    %v1034 = vunpack.c.l.b16 %v1019
    %v1035 = vunpack.c.l.b16 %v1020
    %v1036 = vunpack.c.l.b16 %v1021
    %v1037 = vpack.c.b16 %v1034, %v1033
    %v1038 = vpack.c.b16 %v1036, %v1035
    %1041 = vmatprep.subr.bf16.mxu0 0
    %1042 = vmatpush1.bf16.msra.mxu0 0
    %1043 = vmatprep.subr.bf16.mxu0 0
    %1044 = vmatpush1.bf16.msra.mxu0 0
    %1045 = vmatprep.subr.bf16.mxu0 0
    %1046 = vmatpush1.bf16.msra.mxu0 0
    %1047 = vmatprep.subr.bf16.mxu0 0
    %1048 = vmatpush1.bf16.msra.mxu0 0
    %1049 = vmatprep.subr.bf16.mxu0 0
    %1050 = vmatpush1.bf16.msra.mxu0 0
    %1051 = vmatprep.subr.bf16.mxu0 0
    %1052 = vmatpush1.bf16.msra.mxu0 0
    %1053 = vmatprep.subr.bf16.mxu0 0
    %1054 = vmatpush1.bf16.msra.mxu0 %v1038
    %1055 = vmatprep.subr.bf16.mxu0 0
    %1056 = vmatpush1.bf16.msra.mxu0 %v1037
    %1057 = vmatprep.subr.bf16.mxu0 0
    %1058 = vmatpush2.bf16.msra.mxu0 0
    %1059 = vmatprep.subr.bf16.mxu0 0
    %1060 = vmatpush2.bf16.msra.mxu0 0
    %1061 = vmatprep.subr.bf16.mxu0 0
    %1062 = vmatpush2.bf16.msra.mxu0 0
    %1063 = vmatprep.subr.bf16.mxu0 0
    %1064 = vmatpush2.bf16.msra.mxu0 0
    %1065 = vmatprep.subr.bf16.mxu0 0
    %1066 = vmatpush2.bf16.msra.mxu0 0
    %1067 = vmatprep.subr.bf16.mxu0 0
    %1068 = vmatpush2.bf16.msra.mxu0 0
    %1069 = vmatprep.subr.bf16.mxu0 0
    %1070 = vmatpush2.bf16.msra.mxu0 0
    %1071 = vmatprep.subr.bf16.mxu0 0
    %1072 = vmatpush2.bf16.msra.mxu0 0
    %1073 = vmatprep.mubr.bf16.mxu0 0
    %1074 = vmatmul.mubr.bf16.gmra.mxu0 %v371
    %v1075 = vpop.f32.mrf.mxu0
    %v1076 = vadd.f32 %v1027, %v1075
    %v1077 = vpop.f32.mrf.mxu0
    %v1078 = vpop.f32.mrf.mxu0
    %v1079 = vpop.f32.mrf.mxu0
    %1080 = vdwg.mxu0
    %v1081 = vpack.c.bf16 %v1076, %v1076
    %v1082 = vld [vmem:[#allocation20] sm:$0xf]
    %v1083 = vld [vmem:[#allocation20 + $0x4] sm:$0xf]
    %v1084 = vld [vmem:[#allocation20 + $0x8] sm:$0xf]
    %v1085 = vld [vmem:[#allocation20 + $0xc] sm:$0xf]
    %v1090 = vunpack.c.l.b16 %v1082
    %v1091 = vunpack.c.l.b16 %v1083
    %v1092 = vunpack.c.l.b16 %v1084
    %v1093 = vunpack.c.l.b16 %v1085
    %v1094 = vpack.c.b16 %v1091, %v1090
    %v1095 = vpack.c.b16 %v1093, %v1092
    %v1099 = vsel %vm369, %v1081, 0
    %1101 = vmatprep.subr.bf16.mxu0 0
    %1102 = vmatpush1.bf16.msra.mxu0 0
    %1103 = vmatprep.subr.bf16.mxu0 0
    %1104 = vmatpush1.bf16.msra.mxu0 0
    %1105 = vmatprep.subr.bf16.mxu0 0
    %1106 = vmatpush1.bf16.msra.mxu0 0
    %1107 = vmatprep.subr.bf16.mxu0 0
    %1108 = vmatpush1.bf16.msra.mxu0 0
    %1109 = vmatprep.subr.bf16.mxu0 0
    %1110 = vmatpush1.bf16.msra.mxu0 0
    %1111 = vmatprep.subr.bf16.mxu0 0
    %1112 = vmatpush1.bf16.msra.mxu0 0
    %1113 = vmatprep.subr.bf16.mxu0 0
    %1114 = vmatpush1.bf16.msra.mxu0 %v1095
    %1115 = vmatprep.subr.bf16.mxu0 0
    %1116 = vmatpush1.bf16.msra.mxu0 %v1094
    %1117 = vmatprep.subr.bf16.mxu0 0
    %1118 = vmatpush2.bf16.msra.mxu0 0
    %1119 = vmatprep.subr.bf16.mxu0 0
    %1120 = vmatpush2.bf16.msra.mxu0 0
    %1121 = vmatprep.subr.bf16.mxu0 0
    %1122 = vmatpush2.bf16.msra.mxu0 0
    %1123 = vmatprep.subr.bf16.mxu0 0
    %1124 = vmatpush2.bf16.msra.mxu0 0
    %1125 = vmatprep.subr.bf16.mxu0 0
    %1126 = vmatpush2.bf16.msra.mxu0 0
    %1127 = vmatprep.subr.bf16.mxu0 0
    %1128 = vmatpush2.bf16.msra.mxu0 0
    %1129 = vmatprep.subr.bf16.mxu0 0
    %1130 = vmatpush2.bf16.msra.mxu0 0
    %1131 = vmatprep.subr.bf16.mxu0 0
    %1132 = vmatpush2.bf16.msra.mxu0 0
    %1133 = vmatprep.mubr.bf16.mxu0 0
    %1134 = vmatmul.mubr.bf16.gmra.mxu0 %v1099
    %v1135 = vpop.f32.mrf.mxu0
    %v1136 = vadd.f32 0.0, %v1135
    %v1137 = vpop.f32.mrf.mxu0
    %v1138 = vpop.f32.mrf.mxu0
    %v1139 = vpop.f32.mrf.mxu0
    %1140 = vdwg.mxu0
    %v1141 = vmul.f32 %v1136, 0.17677669
    %vm1142 = vcmp.lt.s32.totalorder %v886, 8
    %vm1143 = vmand %vm887, %vm1142
    %v1144 = vsel %vm1143, 1, 0
    %vm1145 = vcmp.eq.s32.totalorder %v1144, 1
    %v1146 = vsel %vm1145, %v1141, -inf
    %v1147 = vsel %vm369, %v1146, -inf
    %1148 = vmax.xlane.f32.xlu0 %v1147
    %v1149 = vpop.xlane.xlu0 %1148
    %v1150 = vsub.f32 %v1146, %v1149
    %v1151 = vmul.f32 %v1150, 1.442695
    %v1152 = vpow.pop %v1151
    %v1153 = vsel %vm369, %v1152, 0.0
    %1154 = vadd.xlane.f32.xlu0 %v1153
    %v1155 = vpop.xlane.xlu0 %1154
    %v1156 = vrcp.pop %v1155
    %v1157 = vmul.f32 %v1152, %v1156
    %v1158 = vadd.f32 %v1157, 0.0
    %vm1159 = vcmp.ge.s32.totalorder %v886, 8
    %vm1160 = vcmp.lt.s32.totalorder %v886, 16
    %vm1161 = vmand %vm1159, %vm1160
    %v1162 = vsel %vm1161, 1, 0
    %vm1163 = vcmp.eq.s32.totalorder %v1162, 1
    %v1164 = vsel %vm1163, %v1141, -inf
    %v1165 = vsel %vm369, %v1164, -inf
    %1166 = vmax.xlane.f32.xlu0 %v1165
    %v1167 = vpop.xlane.xlu0 %1166
    %v1168 = vsub.f32 %v1164, %v1167
    %v1169 = vmul.f32 %v1168, 1.442695
    %v1170 = vpow.pop %v1169
    %v1171 = vsel %vm369, %v1170, 0.0
    %1172 = vadd.xlane.f32.xlu0 %v1171
    %v1173 = vpop.xlane.xlu0 %1172
    %v1174 = vrcp.pop %v1173
    %v1175 = vmul.f32 %v1170, %v1174
    %v1176 = vadd.f32 %v1158, %v1175
    %vm1177 = vcmp.ge.s32.totalorder %v886, 16
    %vm1178 = vcmp.lt.s32.totalorder %v886, 24
    %vm1179 = vmand %vm1177, %vm1178
    %v1180 = vsel %vm1179, 1, 0
    %vm1181 = vcmp.eq.s32.totalorder %v1180, 1
    %v1182 = vsel %vm1181, %v1141, -inf
    %v1183 = vsel %vm369, %v1182, -inf
    %1184 = vmax.xlane.f32.xlu0 %v1183
    %v1185 = vpop.xlane.xlu0 %1184
    %v1186 = vsub.f32 %v1182, %v1185
    %v1187 = vmul.f32 %v1186, 1.442695
    %v1188 = vpow.pop %v1187
    %v1189 = vsel %vm369, %v1188, 0.0
    %1190 = vadd.xlane.f32.xlu0 %v1189
    %v1191 = vpop.xlane.xlu0 %1190
    %v1192 = vrcp.pop %v1191
    %v1193 = vmul.f32 %v1188, %v1192
    %v1194 = vadd.f32 %v1176, %v1193
    %vm1195 = vcmp.ge.s32.totalorder %v886, 24
    %vm1196 = vmand %vm1195, %vm888
    %v1197 = vsel %vm1196, 1, 0
    %vm1198 = vcmp.eq.s32.totalorder %v1197, 1
    %v1199 = vsel %vm1198, %v1141, -inf
    %v1200 = vsel %vm369, %v1199, -inf
    %1201 = vmax.xlane.f32.xlu0 %v1200
    %v1202 = vpop.xlane.xlu0 %1201
    %v1203 = vsub.f32 %v1199, %v1202
    %v1204 = vmul.f32 %v1203, 1.442695
    %v1205 = vpow.pop %v1204
    %v1206 = vsel %vm369, %v1205, 0.0
    %1207 = vadd.xlane.f32.xlu0 %v1206
    %v1208 = vpop.xlane.xlu0 %1207
    %v1209 = vrcp.pop %v1208
    %v1210 = vmul.f32 %v1205, %v1209
    %v1211 = vadd.f32 %v1194, %v1210
    %v1212 = vmul.f32 %v1211, 0.25
    %v1213 = vpack.c.bf16 %v1212, %v1212
    %v1214 = vld [vmem:[#allocation22] sm:$0xf]
    %v1215 = vld [vmem:[#allocation22 + $0x4] sm:$0xf]
    %v1216 = vld [vmem:[#allocation22 + $0x8] sm:$0xf]
    %v1217 = vld [vmem:[#allocation22 + $0xc] sm:$0xf]
    %v1222 = vunpack.c.l.b16 %v1214
    %v1223 = vunpack.c.l.b16 %v1215
    %v1224 = vunpack.c.l.b16 %v1216
    %v1225 = vunpack.c.l.b16 %v1217
    %v1226 = vpack.c.b16 %v1223, %v1222
    %v1227 = vpack.c.b16 %v1225, %v1224
    %v1231 = vsel %vm369, %v1213, 0
    %1233 = vmatprep.subr.bf16.mxu0 0
    %1234 = vmatpush1.bf16.msra.mxu0 0
    %1235 = vmatprep.subr.bf16.mxu0 0
    %1236 = vmatpush1.bf16.msra.mxu0 0
    %1237 = vmatprep.subr.bf16.mxu0 0
    %1238 = vmatpush1.bf16.msra.mxu0 0
    %1239 = vmatprep.subr.bf16.mxu0 0
    %1240 = vmatpush1.bf16.msra.mxu0 0
    %1241 = vmatprep.subr.bf16.mxu0 0
    %1242 = vmatpush1.bf16.msra.mxu0 0
    %1243 = vmatprep.subr.bf16.mxu0 0
    %1244 = vmatpush1.bf16.msra.mxu0 0
    %1245 = vmatprep.subr.bf16.mxu0 0
    %1246 = vmatpush1.bf16.msra.mxu0 %v1227
    %1247 = vmatprep.subr.bf16.mxu0 0
    %1248 = vmatpush1.bf16.msra.mxu0 %v1226
    %1249 = vmatprep.subr.bf16.mxu0 0
    %1250 = vmatpush2.bf16.msra.mxu0 0
    %1251 = vmatprep.subr.bf16.mxu0 0
    %1252 = vmatpush2.bf16.msra.mxu0 0
    %1253 = vmatprep.subr.bf16.mxu0 0
    %1254 = vmatpush2.bf16.msra.mxu0 0
    %1255 = vmatprep.subr.bf16.mxu0 0
    %1256 = vmatpush2.bf16.msra.mxu0 0
    %1257 = vmatprep.subr.bf16.mxu0 0
    %1258 = vmatpush2.bf16.msra.mxu0 0
    %1259 = vmatprep.subr.bf16.mxu0 0
    %1260 = vmatpush2.bf16.msra.mxu0 0
    %1261 = vmatprep.subr.bf16.mxu0 0
    %1262 = vmatpush2.bf16.msra.mxu0 0
    %1263 = vmatprep.subr.bf16.mxu0 0
    %1264 = vmatpush2.bf16.msra.mxu0 0
    %1265 = vmatprep.mubr.bf16.mxu0 0
    %1266 = vmatmul.mubr.bf16.gmra.mxu0 %v1231
    %v1267 = vpop.f32.mrf.mxu0
    %v1268 = vadd.f32 0.0, %v1267
    %v1269 = vpop.f32.mrf.mxu0
    %v1270 = vpop.f32.mrf.mxu0
    %v1271 = vpop.f32.mrf.mxu0
    %1272 = vdwg.mxu0
    %v1273 = vpack.c.bf16 %v544, %v544
    %v1274 = vld [vmem:[#allocation23] sm:$0xf]
    %v1275 = vld [vmem:[#allocation23 + $0x4] sm:$0xf]
    %v1276 = vld [vmem:[#allocation23 + $0x8] sm:$0xf]
    %v1277 = vld [vmem:[#allocation23 + $0xc] sm:$0xf]
    %v1278 = vpack.c.bf16 %v760, %v760
    %v1279 = vld [vmem:[%s18] sm:$0xf]
    %v1280 = vld [vmem:[%s18 + $0x4] sm:$0xf]
    %v1281 = vld [vmem:[%s18 + $0x8] sm:$0xf]
    %v1282 = vld [vmem:[%s18 + $0xc] sm:$0xf]
    %v1287 = vunpack.c.l.b16 %v1279
    %v1288 = vunpack.c.l.b16 %v1280
    %v1289 = vunpack.c.l.b16 %v1281
    %v1290 = vunpack.c.l.b16 %v1282
    %v1291 = vpack.c.b16 %v1288, %v1287
    %v1292 = vpack.c.b16 %v1290, %v1289
    %v1296 = vsel %vm369, %v1278, 0
    %1298 = vmatprep.subr.bf16.mxu0 0
    %1299 = vmatpush1.bf16.msra.mxu0 0
    %1300 = vmatprep.subr.bf16.mxu0 0
    %1301 = vmatpush1.bf16.msra.mxu0 0
    %1302 = vmatprep.subr.bf16.mxu0 0
    %1303 = vmatpush1.bf16.msra.mxu0 0
    %1304 = vmatprep.subr.bf16.mxu0 0
    %1305 = vmatpush1.bf16.msra.mxu0 0
    %1306 = vmatprep.subr.bf16.mxu0 0
    %1307 = vmatpush1.bf16.msra.mxu0 0
    %1308 = vmatprep.subr.bf16.mxu0 0
    %1309 = vmatpush1.bf16.msra.mxu0 0
    %1310 = vmatprep.subr.bf16.mxu0 0
    %1311 = vmatpush1.bf16.msra.mxu0 %v1292
    %1312 = vmatprep.subr.bf16.mxu0 0
    %1313 = vmatpush1.bf16.msra.mxu0 %v1291
    %1314 = vmatprep.subr.bf16.mxu0 0
    %1315 = vmatpush2.bf16.msra.mxu0 0
    %1316 = vmatprep.subr.bf16.mxu0 0
    %1317 = vmatpush2.bf16.msra.mxu0 0
    %1318 = vmatprep.subr.bf16.mxu0 0
    %1319 = vmatpush2.bf16.msra.mxu0 0
    %1320 = vmatprep.subr.bf16.mxu0 0
    %1321 = vmatpush2.bf16.msra.mxu0 0
    %1322 = vmatprep.subr.bf16.mxu0 0
    %1323 = vmatpush2.bf16.msra.mxu0 0
    %1324 = vmatprep.subr.bf16.mxu0 0
    %1325 = vmatpush2.bf16.msra.mxu0 0
    %1326 = vmatprep.subr.bf16.mxu0 0
    %1327 = vmatpush2.bf16.msra.mxu0 0
    %1328 = vmatprep.subr.bf16.mxu0 0
    %1329 = vmatpush2.bf16.msra.mxu0 0
    %1330 = vmatprep.mubr.bf16.mxu0 0
    %1331 = vmatmul.mubr.bf16.gmra.mxu0 %v1296
    %v1332 = vpop.f32.mrf.mxu0
    %v1333 = vadd.f32 0.0, %v1332
    %v1334 = vpop.f32.mrf.mxu0
    %v1335 = vpop.f32.mrf.mxu0
    %v1336 = vpop.f32.mrf.mxu0
    %1337 = vdwg.mxu0
    %v1342 = vunpack.c.l.b16 %v1274
    %v1343 = vunpack.c.l.b16 %v1275
    %v1344 = vunpack.c.l.b16 %v1276
    %v1345 = vunpack.c.l.b16 %v1277
    %v1346 = vpack.c.b16 %v1343, %v1342
    %v1347 = vpack.c.b16 %v1345, %v1344
    %v1351 = vsel %vm369, %v1273, 0
    %1353 = vmatprep.subr.bf16.mxu0 0
    %1354 = vmatpush1.bf16.msra.mxu0 0
    %1355 = vmatprep.subr.bf16.mxu0 0
    %1356 = vmatpush1.bf16.msra.mxu0 0
    %1357 = vmatprep.subr.bf16.mxu0 0
    %1358 = vmatpush1.bf16.msra.mxu0 0
    %1359 = vmatprep.subr.bf16.mxu0 0
    %1360 = vmatpush1.bf16.msra.mxu0 0
    %1361 = vmatprep.subr.bf16.mxu0 0
    %1362 = vmatpush1.bf16.msra.mxu0 0
    %1363 = vmatprep.subr.bf16.mxu0 0
    %1364 = vmatpush1.bf16.msra.mxu0 0
    %1365 = vmatprep.subr.bf16.mxu0 0
    %1366 = vmatpush1.bf16.msra.mxu0 %v1347
    %1367 = vmatprep.subr.bf16.mxu0 0
    %1368 = vmatpush1.bf16.msra.mxu0 %v1346
    %1369 = vmatprep.subr.bf16.mxu0 0
    %1370 = vmatpush2.bf16.msra.mxu0 0
    %1371 = vmatprep.subr.bf16.mxu0 0
    %1372 = vmatpush2.bf16.msra.mxu0 0
    %1373 = vmatprep.subr.bf16.mxu0 0
    %1374 = vmatpush2.bf16.msra.mxu0 0
    %1375 = vmatprep.subr.bf16.mxu0 0
    %1376 = vmatpush2.bf16.msra.mxu0 0
    %1377 = vmatprep.subr.bf16.mxu0 0
    %1378 = vmatpush2.bf16.msra.mxu0 0
    %1379 = vmatprep.subr.bf16.mxu0 0
    %1380 = vmatpush2.bf16.msra.mxu0 0
    %1381 = vmatprep.subr.bf16.mxu0 0
    %1382 = vmatpush2.bf16.msra.mxu0 0
    %1383 = vmatprep.subr.bf16.mxu0 0
    %1384 = vmatpush2.bf16.msra.mxu0 0
    %1385 = vmatprep.mubr.bf16.mxu0 0
    %1386 = vmatmul.mubr.bf16.gmra.mxu0 %v1351
    %v1387 = vpop.f32.mrf.mxu0
    %v1388 = vadd.f32 %v1333, %v1387
    %v1389 = vpop.f32.mrf.mxu0
    %v1390 = vpop.f32.mrf.mxu0
    %v1391 = vpop.f32.mrf.mxu0
    %1392 = vdwg.mxu0
    %v1393 = vpack.c.bf16 %v1013, %v1013
    %v1394 = vld [vmem:[#allocation25] sm:$0xf]
    %v1395 = vld [vmem:[#allocation25 + $0x4] sm:$0xf]
    %v1396 = vld [vmem:[#allocation25 + $0x8] sm:$0xf]
    %v1397 = vld [vmem:[#allocation25 + $0xc] sm:$0xf]
    %v1402 = vunpack.c.l.b16 %v1394
    %v1403 = vunpack.c.l.b16 %v1395
    %v1404 = vunpack.c.l.b16 %v1396
    %v1405 = vunpack.c.l.b16 %v1397
    %v1406 = vpack.c.b16 %v1403, %v1402
    %v1407 = vpack.c.b16 %v1405, %v1404
    %v1411 = vsel %vm369, %v1393, 0
    %1413 = vmatprep.subr.bf16.mxu0 0
    %1414 = vmatpush1.bf16.msra.mxu0 0
    %1415 = vmatprep.subr.bf16.mxu0 0
    %1416 = vmatpush1.bf16.msra.mxu0 0
    %1417 = vmatprep.subr.bf16.mxu0 0
    %1418 = vmatpush1.bf16.msra.mxu0 0
    %1419 = vmatprep.subr.bf16.mxu0 0
    %1420 = vmatpush1.bf16.msra.mxu0 0
    %1421 = vmatprep.subr.bf16.mxu0 0
    %1422 = vmatpush1.bf16.msra.mxu0 0
    %1423 = vmatprep.subr.bf16.mxu0 0
    %1424 = vmatpush1.bf16.msra.mxu0 0
    %1425 = vmatprep.subr.bf16.mxu0 0
    %1426 = vmatpush1.bf16.msra.mxu0 %v1407
    %1427 = vmatprep.subr.bf16.mxu0 0
    %1428 = vmatpush1.bf16.msra.mxu0 %v1406
    %1429 = vmatprep.subr.bf16.mxu0 0
    %1430 = vmatpush2.bf16.msra.mxu0 0
    %1431 = vmatprep.subr.bf16.mxu0 0
    %1432 = vmatpush2.bf16.msra.mxu0 0
    %1433 = vmatprep.subr.bf16.mxu0 0
    %1434 = vmatpush2.bf16.msra.mxu0 0
    %1435 = vmatprep.subr.bf16.mxu0 0
    %1436 = vmatpush2.bf16.msra.mxu0 0
    %1437 = vmatprep.subr.bf16.mxu0 0
    %1438 = vmatpush2.bf16.msra.mxu0 0
    %1439 = vmatprep.subr.bf16.mxu0 0
    %1440 = vmatpush2.bf16.msra.mxu0 0
    %1441 = vmatprep.subr.bf16.mxu0 0
    %1442 = vmatpush2.bf16.msra.mxu0 0
    %1443 = vmatprep.subr.bf16.mxu0 0
    %1444 = vmatpush2.bf16.msra.mxu0 0
    %1445 = vmatprep.mubr.bf16.mxu0 0
    %1446 = vmatmul.mubr.bf16.gmra.mxu0 %v1411
    %v1447 = vpop.f32.mrf.mxu0
    %v1448 = vadd.f32 0.0, %v1447
    %v1449 = vpop.f32.mrf.mxu0
    %v1450 = vpop.f32.mrf.mxu0
    %v1451 = vpop.f32.mrf.mxu0
    %1452 = vdwg.mxu0
    %v1453 = vadd.f32 %v1388, %v1448
    %v1454 = vpack.c.bf16 %v1268, %v1268
    %v1455 = vld [vmem:[#allocation26] sm:$0xf]
    %v1456 = vld [vmem:[#allocation26 + $0x4] sm:$0xf]
    %v1457 = vld [vmem:[#allocation26 + $0x8] sm:$0xf]
    %v1458 = vld [vmem:[#allocation26 + $0xc] sm:$0xf]
    %v1463 = vunpack.c.l.b16 %v1455
    %v1464 = vunpack.c.l.b16 %v1456
    %v1465 = vunpack.c.l.b16 %v1457
    %v1466 = vunpack.c.l.b16 %v1458
    %v1467 = vpack.c.b16 %v1464, %v1463
    %v1468 = vpack.c.b16 %v1466, %v1465
    %v1472 = vsel %vm369, %v1454, 0
    %1474 = vmatprep.subr.bf16.mxu0 0
    %1475 = vmatpush1.bf16.msra.mxu0 0
    %1476 = vmatprep.subr.bf16.mxu0 0
    %1477 = vmatpush1.bf16.msra.mxu0 0
    %1478 = vmatprep.subr.bf16.mxu0 0
    %1479 = vmatpush1.bf16.msra.mxu0 0
    %1480 = vmatprep.subr.bf16.mxu0 0
    %1481 = vmatpush1.bf16.msra.mxu0 0
    %1482 = vmatprep.subr.bf16.mxu0 0
    %1483 = vmatpush1.bf16.msra.mxu0 0
    %1484 = vmatprep.subr.bf16.mxu0 0
    %1485 = vmatpush1.bf16.msra.mxu0 0
    %1486 = vmatprep.subr.bf16.mxu0 0
    %1487 = vmatpush1.bf16.msra.mxu0 %v1468
    %1488 = vmatprep.subr.bf16.mxu0 0
    %1489 = vmatpush1.bf16.msra.mxu0 %v1467
    %1490 = vmatprep.subr.bf16.mxu0 0
    %1491 = vmatpush2.bf16.msra.mxu0 0
    %1492 = vmatprep.subr.bf16.mxu0 0
    %1493 = vmatpush2.bf16.msra.mxu0 0
    %1494 = vmatprep.subr.bf16.mxu0 0
    %1495 = vmatpush2.bf16.msra.mxu0 0
    %1496 = vmatprep.subr.bf16.mxu0 0
    %1497 = vmatpush2.bf16.msra.mxu0 0
    %1498 = vmatprep.subr.bf16.mxu0 0
    %1499 = vmatpush2.bf16.msra.mxu0 0
    %1500 = vmatprep.subr.bf16.mxu0 0
    %1501 = vmatpush2.bf16.msra.mxu0 0
    %1502 = vmatprep.subr.bf16.mxu0 0
    %1503 = vmatpush2.bf16.msra.mxu0 0
    %1504 = vmatprep.subr.bf16.mxu0 0
    %1505 = vmatpush2.bf16.msra.mxu0 0
    %1506 = vmatprep.mubr.bf16.mxu0 0
    %1507 = vmatmul.mubr.bf16.gmra.mxu0 %v1472
    %v1508 = vpop.f32.mrf.mxu0
    %v1509 = vadd.f32 0.0, %v1508
    %v1510 = vpop.f32.mrf.mxu0
    %v1511 = vpop.f32.mrf.mxu0
    %v1512 = vpop.f32.mrf.mxu0
    %1513 = vdwg.mxu0
    %v1514 = vadd.f32 %v1453, %v1509
    %v1515 = vld [vmem:[%s21] sm:$0x1]
    %v1517 = vlaneseq
    %v1518 = vshrl.u32 %v1517, 7
    %v1519 = vsub.s32 0, %v1518
    %v1520 = vrot.slane %v1515, %v1519
    %v1522 = vadd.f32 %v1514, %v1520
    %v1523 = vmax.f32 %v1522, 0.0
    %v1524 = vpack.c.bf16 %v1523, %v1523
    %v1525 = vld [vmem:[%s22] sm:$0xf]
    %v1526 = vld [vmem:[%s22 + $0x4] sm:$0xf]
    %v1527 = vld [vmem:[%s22 + $0x8] sm:$0xf]
    %v1528 = vld [vmem:[%s22 + $0xc] sm:$0xf]
    %v1529 = vld [vmem:[%s22 + $0x10] sm:$0xf]
    %v1530 = vld [vmem:[%s22 + $0x14] sm:$0xf]
    %v1531 = vld [vmem:[%s22 + $0x18] sm:$0xf]
    %v1532 = vld [vmem:[%s22 + $0x1c] sm:$0xf]
    %v1533 = vld [vmem:[%s23] sm:$0x1]
    %v1535 = vlaneseq
    %v1536 = vshrl.u32 %v1535, 7
    %v1537 = vsub.s32 0, %v1536
    %v1538 = vrot.slane %v1533, %v1537
    %v1548 = vunpack.c.l.b16 %v1525
    %v1549 = vunpack.c.l.b16 %v1526
    %v1550 = vunpack.c.l.b16 %v1527
    %v1551 = vunpack.c.l.b16 %v1528
    %v1552 = vunpack.c.l.b16 %v1529
    %v1553 = vunpack.c.l.b16 %v1530
    %v1554 = vunpack.c.l.b16 %v1531
    %v1555 = vunpack.c.l.b16 %v1532
    %v1556 = vpack.c.b16 %v1549, %v1548
    %v1557 = vpack.c.b16 %v1551, %v1550
    %v1558 = vpack.c.b16 %v1553, %v1552
    %v1559 = vpack.c.b16 %v1555, %v1554
    %vm1564 = vcmask 523264
    %v1566 = vsel %vm1564, %v1524, 0
    %1568 = vmatprep.subr.bf16.mxu0 0
    %1569 = vmatpush1.bf16.msra.mxu0 0
    %1570 = vmatprep.subr.bf16.mxu0 0
    %1571 = vmatpush1.bf16.msra.mxu0 0
    %1572 = vmatprep.subr.bf16.mxu0 0
    %1573 = vmatpush1.bf16.msra.mxu0 0
    %1574 = vmatprep.subr.bf16.mxu0 0
    %1575 = vmatpush1.bf16.msra.mxu0 0
    %1576 = vmatprep.subr.bf16.mxu0 0
    %1577 = vmatpush1.bf16.msra.mxu0 %v1559
    %1578 = vmatprep.subr.bf16.mxu0 0
    %1579 = vmatpush1.bf16.msra.mxu0 %v1558
    %1580 = vmatprep.subr.bf16.mxu0 0
    %1581 = vmatpush1.bf16.msra.mxu0 %v1557
    %1582 = vmatprep.subr.bf16.mxu0 0
    %1583 = vmatpush1.bf16.msra.mxu0 %v1556
    %1584 = vmatprep.subr.bf16.mxu0 0
    %1585 = vmatpush2.bf16.msra.mxu0 0
    %1586 = vmatprep.subr.bf16.mxu0 0
    %1587 = vmatpush2.bf16.msra.mxu0 0
    %1588 = vmatprep.subr.bf16.mxu0 0
    %1589 = vmatpush2.bf16.msra.mxu0 0
    %1590 = vmatprep.subr.bf16.mxu0 0
    %1591 = vmatpush2.bf16.msra.mxu0 0
    %1592 = vmatprep.subr.bf16.mxu0 0
    %1593 = vmatpush2.bf16.msra.mxu0 0
    %1594 = vmatprep.subr.bf16.mxu0 0
    %1595 = vmatpush2.bf16.msra.mxu0 0
    %1596 = vmatprep.subr.bf16.mxu0 0
    %1597 = vmatpush2.bf16.msra.mxu0 0
    %1598 = vmatprep.subr.bf16.mxu0 0
    %1599 = vmatpush2.bf16.msra.mxu0 0
    %1600 = vmatprep.mubr.bf16.mxu0 0
    %1601 = vmatmul.mubr.bf16.gmra.mxu0 %v1566
    %v1602 = vpop.f32.mrf.mxu0
    %v1603 = vadd.f32 %v1538, %v1602
    %v1604 = vpop.f32.mrf.mxu0
    %v1605 = vpop.f32.mrf.mxu0
    %v1606 = vpop.f32.mrf.mxu0
    %1607 = vdwg.mxu0
    %1608 = vst [vmem:[#allocation28] sm:$0xff] %v1603
    // Predicated region
    $region162: #{tpu_custom_call.1} parent=1 // pred_check
      _
    $region163: #{tpu_custom_call.1} parent=1 // pred_check_branch
      %1610 = sbr.rel (0) target = $region165
    $region164: #{tpu_custom_call.1} parent=1 // pred_region
      %s1612 = ssub.s32 128, 128
      %1613 = vsyncadd [#allocation4], %s1612
      %s1615 = sshll.u32 [#allocation28], 4
      %s1616 = int_to_ptr.vmem [resolvable:$true] %s1615
      %1618 = dma.vmem_to_hbm [thread:$0]  %s1616, 128, %s24, [#allocation4]
    $region165: #{tpu_custom_call.1} parent=1 // pred_fallthru
      _
    // Predicated region
    $region166: #{tpu_custom_call.1} parent=1 // pred_check
      _
    $region167: #{tpu_custom_call.1} parent=1 // pred_check_branch
      %1620 = sbr.rel (0) target = $region169
    $region168: #{tpu_custom_call.1} parent=1 // pred_region
      %1621 = dma.done [#allocation4], 128
    $region169: #{tpu_custom_call.1} parent=1 // pred_fallthru
      _
    %1622 = vsyncpa [#allocation3], 1
    %1623 = vsyncpa [#allocation6], 1
    %1624 = vsyncpa [#allocation9], 1
    %1625 = vsyncpa [#allocation12], 1
    %1626 = vsyncpa [#allocation15], 1
    %1627 = vsyncpa [#allocation18], 1
    %1628 = vsyncpa [#allocation21], 1
    %1629 = vsyncpa [#allocation24], 1
    %1630 = vsyncpa [#allocation27], 1
    %1631 = vsyncpa [#allocation4], 1

</llo_original>
